<compile_context>
chip_gen: v7x
topology: tpu7x:2x2x1
jax: 0.10.0
libtpu: 0.0.40
codegen_flags: <defaults>
</compile_context>

<pallas_src>
import functools

import jax
import jax.numpy as jnp
from jax import lax
from jax.experimental import pallas as pl
from jax.experimental.pallas import tpu as pltpu


def _bn_sigmoid_conv_kernel(x_ref, scale_ref, shift_ref, w_ref, coords_ref,
                            o_ref, stack_ref, *, cin, vol):
    # x_ref:       (Cin, L)          unpadded flattened activations (lanes = d,h,w)
    # scale/shift: (Cin, 1)          folded BatchNorm affine (per channel), f32
    # w_ref:       (Cout, 28*Cin)    conv taps stacked along K, t = kd*9 + kh*3 + kw
    #                                (tap 27 is a zero pad so K stays 16-row aligned)
    # coords_ref:  (3, L) int32      per-lane (d, h, w) coordinates
    # o_ref:       (Cout, L) f32     lane-dense output tile
    # stack_ref:   (28*Cin, L) bf16  VMEM scratch of shifted/masked activations
    D, H, W = vol
    HW = H * W
    f32 = jnp.float32

    # BatchNorm (folded) + sigmoid, kept in f32; cast to bf16 only at the store.
    a = jax.nn.sigmoid(x_ref[...] * scale_ref[...] + shift_ref[...])
    L = a.shape[-1]

    # Per-axis neighbour-validity masks (this implements the conv zero padding),
    # built once from the lane-coordinate table and broadcast to (Cin, L) once
    # (hoisted: no per-tap sublane broadcasts inside the 27-tap loop below).
    d_i = coords_ref[0:1, :]
    h_i = coords_ref[1:2, :]
    w_i = coords_ref[2:3, :]

    def full_mask(cond):                      # (1, L) bool -> (cin, L) f32
        return jnp.broadcast_to(cond.astype(f32), (cin, L))

    md = (full_mask(d_i >= 1), None, full_mask(d_i <= D - 2))   # index = kd
    mh = (full_mask(h_i >= 1), None, full_mask(h_i <= H - 2))   # index = kh
    mw = (full_mask(w_i >= 1), None, full_mask(w_i <= W - 2))   # index = kw

    def shifted(v, delta):
        # v[p] -> v[(p + delta) mod L]; wrapped reads are always zeroed by a mask
        # and in-bounds neighbours never wrap (L == D*H*W, row-major flatten).
        return v if delta == 0 else pltpu.roll(v, (-delta) % L, axis=1)

    # Hierarchical masked rolls in tap order t = kd*9 + kh*3 + kw (matches the K
    # layout of w_ref).  Consecutive taps are paired so that every bf16 store is
    # a full, 16-sublane-aligned packed tile (no masked / RMW stores).
    prev = None
    for kd in range(3):
        ad = shifted(a, (kd - 1) * HW)
        if md[kd] is not None:
            ad = ad * md[kd]
        for kh in range(3):
            adh = shifted(ad, (kh - 1) * W)
            if mh[kh] is not None:
                adh = adh * mh[kh]
            for kw in range(3):
                v = shifted(adh, kw - 1)
                if mw[kw] is not None:
                    v = v * mw[kw]
                t = kd * 9 + kh * 3 + kw
                if prev is None:
                    prev = v
                else:
                    pair = jnp.concatenate([prev, v], axis=0).astype(jnp.bfloat16)
                    stack_ref[pl.ds((t - 1) * cin, 2 * cin), :] = pair
                    prev = None
    # last (27th) tap, paired with the all-zero pad tap so the store stays aligned
    pair = jnp.concatenate([prev, jnp.zeros_like(prev)], axis=0).astype(jnp.bfloat16)
    stack_ref[pl.ds(26 * cin, 2 * cin), :] = pair

    # One big MXU matmul: (Cout, 28*Cin) x (28*Cin, L), bf16 inputs, f32 accumulate.
    o_ref[...] = jnp.dot(w_ref[...], stack_ref[...],
                         preferred_element_type=jnp.float32).astype(o_ref.dtype)


def bn_sigmoid_conv(x, gamma, beta, weight, eps=1e-5):
    """BatchNorm3d (training-mode batch stats) -> Sigmoid -> Conv3d(3x3x3, pad 1).

    x: (N, Cin, D, H, W) f32, gamma/beta: (Cin,), weight: (Cout, Cin, 3, 3, 3).
    Returns (N, Cout, D, H, W) f32.
    """
    N, Cin, D, H, W = x.shape
    Cout = weight.shape[0]
    DHW = D * H * W

    # Alignment guards (avoid documented perf cliffs: sublane-misaligned stack
    # stores and masked output vst).
    # TODO(synk): pad channels / lanes for the fully general shape path.
    if Cin % 8 != 0:
        raise ValueError(f"Cin={Cin} must be a multiple of 8")
    if DHW % 128 != 0:
        raise ValueError(f"D*H*W={DHW} must be a multiple of 128")

    # --- BatchNorm batch statistics in ONE pass over x (sum + sum-of-squares),
    #     biased variance as PyTorch uses for normalization in training mode.
    cnt = N * DHW
    s1 = jnp.sum(x, axis=(0, 2, 3, 4))
    s2 = jnp.sum(x * x, axis=(0, 2, 3, 4))
    mean = s1 / cnt
    var = s2 / cnt - mean * mean
    scale = gamma / jnp.sqrt(var + eps)
    shift = beta - mean * scale

    # --- unpadded flatten (free reshape; no regroup HBM passes) ---
    x_flat = x.reshape(N, Cin, DHW).astype(jnp.float32)

    # --- tiny (3, L) int32 lane-coordinate table (replaces the old (27, L) f32 mask) ---
    d_idx, h_idx, w_idx = jnp.meshgrid(jnp.arange(D), jnp.arange(H), jnp.arange(W),
                                       indexing="ij")
    coords = jnp.stack([d_idx.reshape(-1), h_idx.reshape(-1),
                        w_idx.reshape(-1)]).astype(jnp.int32)

    # --- conv taps pre-reshaped to (Cout, 28*Cin) bf16, K-order (kd, kh, kw, cin);
    #     the extra Cin columns are zero (matching the kernel's zero pad tap).
    w_big = jnp.transpose(weight, (0, 2, 3, 4, 1)).reshape(Cout, 27 * Cin)
    w_big = jnp.pad(w_big, ((0, 0), (0, Cin))).astype(jnp.bfloat16)
    K = 28 * Cin

    # --- explicit per-step VMEM budget (v7x: 64 MiB/TC; re-derive before scaling L) ---
    stack_bytes = K * DHW * 2                               # bf16 tap stack (single copy)
    stream_bytes = 2 * (Cin + Cout) * DHW * 4               # x + out, double-buffered f32
    const_bytes = 2 * (Cout * K * 2 + 8 * DHW * 4 + 2 * 8 * 128 * 4)
    vmem_limit = stack_bytes + stream_bytes + const_bytes + (16 << 20)

    # NOTE: after dropping the (27, L) mask input, the constant-index inputs total
    # only a few KiB, so their default double-buffering is noise; switch them to
    # pipeline_mode=pl.Buffered(1) if they are ever scaled up.
    kernel = functools.partial(_bn_sigmoid_conv_kernel, cin=Cin, vol=(D, H, W))
    out = pl.pallas_call(
        kernel,
        out_shape=jax.ShapeDtypeStruct((N, Cout, DHW), jnp.float32),
        grid=(N,),
        in_specs=[
            pl.BlockSpec((None, Cin, DHW), lambda n: (n, 0, 0)),   # x block
            pl.BlockSpec((Cin, 1), lambda n: (0, 0)),              # BN scale
            pl.BlockSpec((Cin, 1), lambda n: (0, 0)),              # BN shift
            pl.BlockSpec((Cout, K), lambda n: (0, 0)),             # stacked conv taps (bf16)
            pl.BlockSpec((3, DHW), lambda n: (0, 0)),              # lane coords (int32)
        ],
        out_specs=pl.BlockSpec((None, Cout, DHW), lambda n: (n, 0, 0)),
        scratch_shapes=[pltpu.VMEM((K, DHW), jnp.bfloat16)],
        compiler_params=pltpu.CompilerParams(
            dimension_semantics=("parallel",),
            vmem_limit_bytes=int(vmem_limit)),
    )(x_flat,
      scale.reshape(Cin, 1).astype(jnp.float32),
      shift.reshape(Cin, 1).astype(jnp.float32),
      w_big, coords)

    return out.reshape(N, Cout, D, H, W)


def _reference(x, gamma, beta, weight, eps=1e-5):
    mean = jnp.mean(x, axis=(0, 2, 3, 4), keepdims=True)
    var = jnp.var(x, axis=(0, 2, 3, 4), keepdims=True)
    xhat = (x - mean) / jnp.sqrt(var + eps)
    a = jax.nn.sigmoid(xhat * gamma[None, :, None, None, None]
                       + beta[None, :, None, None, None])
    return lax.conv_general_dilated(
        a, weight, window_strides=(1, 1, 1),
        padding=((1, 1), (1, 1), (1, 1)),
        dimension_numbers=("NCDHW", "OIDHW", "NCDHW"),
        precision=lax.Precision.HIGHEST)


if __name__ == "__main__":
    key = jax.random.PRNGKey(0)
    kx, kg, kb, kw = jax.random.split(key, 4)

    N, Cin, Cout, D, H, W = 4, 8, 16, 8, 8, 8
    x = jax.random.normal(kx, (N, Cin, D, H, W), jnp.float32)
    gamma = 1.0 + 0.1 * jax.random.normal(kg, (Cin,), jnp.float32)
    beta = 0.1 * jax.random.normal(kb, (Cin,), jnp.float32)
    weight = 0.1 * jax.random.normal(kw, (Cout, Cin, 3, 3, 3), jnp.float32)

    out = jax.block_until_ready(bn_sigmoid_conv(x, gamma, beta, weight))
    assert out.shape == (N, Cout, D, H, W), out.shape

    ref = _reference(x, gamma, beta, weight)
    # bf16 tap stack / bf16 conv weights with f32 accumulation -> mixed-precision tol.
    if not jnp.allclose(out, ref, atol=1e-2, rtol=1e-2):
        raise AssertionError(
            f"mismatch vs reference, max |diff| = {jnp.max(jnp.abs(out - ref))}")

    print("KERNEL_OK")
</pallas_src>

<mosaic_0001>
module attributes {stable_mosaic.version = 11 : i64} {
  func.func @_bn_sigmoid_conv_kernel(%arg0: i32, %arg1: memref<1x8x512xf32, #tpu.memory_space<vmem>>, %arg2: memref<8x1xf32, #tpu.memory_space<vmem>>, %arg3: memref<8x1xf32, #tpu.memory_space<vmem>>, %arg4: memref<16x224xbf16, #tpu.memory_space<vmem>>, %arg5: memref<3x512xi32, #tpu.memory_space<vmem>>, %arg6: memref<1x16x512xf32, #tpu.memory_space<vmem>>, %arg7: memref<224x512xbf16, #tpu.memory_space<vmem>>) attributes {dimension_semantics = [#tpu.dimension_semantics<parallel>], iteration_bounds = array<i64: 4>, scalar_prefetch = 0 : i64, scratch_operands = 1 : i64, tpu.core_type = #tpu.core_type<tc>, window_params = [{transform_indices = @transform_0, window_bounds = array<i64: 1, 8, 512>}, {pipeline_mode = #tpu.pipeline_mode<synchronous>, transform_indices = @transform_1, window_bounds = array<i64: 8, 1>}, {pipeline_mode = #tpu.pipeline_mode<synchronous>, transform_indices = @transform_2, window_bounds = array<i64: 8, 1>}, {pipeline_mode = #tpu.pipeline_mode<synchronous>, transform_indices = @transform_3, window_bounds = array<i64: 16, 224>}, {pipeline_mode = #tpu.pipeline_mode<synchronous>, transform_indices = @transform_4, window_bounds = array<i64: 3, 512>}, {transform_indices = @transform_5, window_bounds = array<i64: 1, 16, 512>}]} {
    %c0 = arith.constant 0 : index
    %c0_0 = arith.constant 0 : index
    %c0_1 = arith.constant 0 : index
    %0 = vector.load %arg1[%c0, %c0_0, %c0_1] : memref<1x8x512xf32, #tpu.memory_space<vmem>>, vector<1x8x512xf32>
    %1 = vector.shape_cast %0 : vector<1x8x512xf32> to vector<8x512xf32>
    %c0_2 = arith.constant 0 : index
    %c0_3 = arith.constant 0 : index
    %2 = vector.load %arg2[%c0_2, %c0_3] : memref<8x1xf32, #tpu.memory_space<vmem>>, vector<8x1xf32>
    %3 = vector.broadcast %2 : vector<8x1xf32> to vector<8x512xf32>
    %4 = arith.mulf %1, %3 : vector<8x512xf32>
    %c0_4 = arith.constant 0 : index
    %c0_5 = arith.constant 0 : index
    %5 = vector.load %arg3[%c0_4, %c0_5] : memref<8x1xf32, #tpu.memory_space<vmem>>, vector<8x1xf32>
    %6 = vector.broadcast %5 : vector<8x1xf32> to vector<8x512xf32>
    %7 = arith.addf %4, %6 : vector<8x512xf32>
    %8 = arith.negf %7 : vector<8x512xf32>
    %9 = math.exp %8 : vector<8x512xf32>
    %cst = arith.constant 1.000000e+00 : f32
    %10 = vector.broadcast %cst : f32 to vector<8x512xf32>
    %11 = arith.addf %10, %9 : vector<8x512xf32>
    %12 = arith.divf %10, %11 : vector<8x512xf32>
    %c0_6 = arith.constant 0 : index
    %c0_7 = arith.constant 0 : index
    %13 = vector.load %arg5[%c0_6, %c0_7] : memref<3x512xi32, #tpu.memory_space<vmem>>, vector<1x512xi32>
    %c1 = arith.constant 1 : index
    %c0_8 = arith.constant 0 : index
    %14 = vector.load %arg5[%c1, %c0_8] : memref<3x512xi32, #tpu.memory_space<vmem>>, vector<1x512xi32>
    %c2 = arith.constant 2 : index
    %c0_9 = arith.constant 0 : index
    %15 = vector.load %arg5[%c2, %c0_9] : memref<3x512xi32, #tpu.memory_space<vmem>>, vector<1x512xi32>
    %c1_i32 = arith.constant 1 : i32
    %16 = vector.broadcast %c1_i32 : i32 to vector<1x512xi32>
    %17 = arith.cmpi sge, %13, %16 : vector<1x512xi32>
    %18 = arith.extui %17 : vector<1x512xi1> to vector<1x512xi32>
    %19 = arith.sitofp %18 : vector<1x512xi32> to vector<1x512xf32>
    %20 = vector.shape_cast %19 : vector<1x512xf32> to vector<1x512xf32>
    %21 = vector.broadcast %20 : vector<1x512xf32> to vector<8x512xf32>
    %c6_i32 = arith.constant 6 : i32
    %22 = vector.broadcast %c6_i32 : i32 to vector<1x512xi32>
    %23 = arith.cmpi sle, %13, %22 : vector<1x512xi32>
    %24 = arith.extui %23 : vector<1x512xi1> to vector<1x512xi32>
    %25 = arith.sitofp %24 : vector<1x512xi32> to vector<1x512xf32>
    %26 = vector.shape_cast %25 : vector<1x512xf32> to vector<1x512xf32>
    %27 = vector.broadcast %26 : vector<1x512xf32> to vector<8x512xf32>
    %c1_i32_10 = arith.constant 1 : i32
    %28 = vector.broadcast %c1_i32_10 : i32 to vector<1x512xi32>
    %29 = arith.cmpi sge, %14, %28 : vector<1x512xi32>
    %30 = arith.extui %29 : vector<1x512xi1> to vector<1x512xi32>
    %31 = arith.sitofp %30 : vector<1x512xi32> to vector<1x512xf32>
    %32 = vector.shape_cast %31 : vector<1x512xf32> to vector<1x512xf32>
    %33 = vector.broadcast %32 : vector<1x512xf32> to vector<8x512xf32>
    %c6_i32_11 = arith.constant 6 : i32
    %34 = vector.broadcast %c6_i32_11 : i32 to vector<1x512xi32>
    %35 = arith.cmpi sle, %14, %34 : vector<1x512xi32>
    %36 = arith.extui %35 : vector<1x512xi1> to vector<1x512xi32>
    %37 = arith.sitofp %36 : vector<1x512xi32> to vector<1x512xf32>
    %38 = vector.shape_cast %37 : vector<1x512xf32> to vector<1x512xf32>
    %39 = vector.broadcast %38 : vector<1x512xf32> to vector<8x512xf32>
    %c1_i32_12 = arith.constant 1 : i32
    %40 = vector.broadcast %c1_i32_12 : i32 to vector<1x512xi32>
    %41 = arith.cmpi sge, %15, %40 : vector<1x512xi32>
    %42 = arith.extui %41 : vector<1x512xi1> to vector<1x512xi32>
    %43 = arith.sitofp %42 : vector<1x512xi32> to vector<1x512xf32>
    %44 = vector.shape_cast %43 : vector<1x512xf32> to vector<1x512xf32>
    %45 = vector.broadcast %44 : vector<1x512xf32> to vector<8x512xf32>
    %c6_i32_13 = arith.constant 6 : i32
    %46 = vector.broadcast %c6_i32_13 : i32 to vector<1x512xi32>
    %47 = arith.cmpi sle, %15, %46 : vector<1x512xi32>
    %48 = arith.extui %47 : vector<1x512xi1> to vector<1x512xi32>
    %49 = arith.sitofp %48 : vector<1x512xi32> to vector<1x512xf32>
    %50 = vector.shape_cast %49 : vector<1x512xf32> to vector<1x512xf32>
    %51 = vector.broadcast %50 : vector<1x512xf32> to vector<8x512xf32>
    %c64_i32 = arith.constant 64 : i32
    %52 = tpu.dynamic_rotate %12 by %c64_i32 dim 1 : vector<8x512xf32>, i32 -> vector<8x512xf32>
    %53 = arith.mulf %52, %21 : vector<8x512xf32>
    %c8_i32 = arith.constant 8 : i32
    %54 = tpu.dynamic_rotate %53 by %c8_i32 dim 1 : vector<8x512xf32>, i32 -> vector<8x512xf32>
    %55 = arith.mulf %54, %33 : vector<8x512xf32>
    %c1_i32_14 = arith.constant 1 : i32
    %56 = tpu.dynamic_rotate %55 by %c1_i32_14 dim 1 : vector<8x512xf32>, i32 -> vector<8x512xf32>
    %57 = arith.mulf %56, %45 : vector<8x512xf32>
    %58 = tpu.concatenate %57, %55 in 0 : vector<8x512xf32>, vector<8x512xf32> -> vector<16x512xf32>
    %59 = arith.truncf %58 : vector<16x512xf32> to vector<16x512xbf16>
    %c0_15 = arith.constant 0 : index
    %c0_16 = arith.constant 0 : index
    %60 = vector.load %arg7[%c0_15, %c0_16] : memref<224x512xbf16, #tpu.memory_space<vmem>>, vector<16x512xbf16>
    tpu.vector_store %arg7[%c0_15, %c0_16], %59 {strides = array<i32>} : memref<224x512xbf16, #tpu.memory_space<vmem>>, vector<16x512xbf16>,
    %c511_i32 = arith.constant 511 : i32
    %61 = tpu.dynamic_rotate %55 by %c511_i32 dim 1 : vector<8x512xf32>, i32 -> vector<8x512xf32>
    %62 = arith.mulf %61, %51 : vector<8x512xf32>
    %c1_i32_17 = arith.constant 1 : i32
    %63 = tpu.dynamic_rotate %53 by %c1_i32_17 dim 1 : vector<8x512xf32>, i32 -> vector<8x512xf32>
    %64 = arith.mulf %63, %45 : vector<8x512xf32>
    %65 = tpu.concatenate %62, %64 in 0 : vector<8x512xf32>, vector<8x512xf32> -> vector<16x512xf32>
    %66 = arith.truncf %65 : vector<16x512xf32> to vector<16x512xbf16>
    %c16 = arith.constant 16 : index
    %c0_18 = arith.constant 0 : index
    %67 = vector.load %arg7[%c16, %c0_18] : memref<224x512xbf16, #tpu.memory_space<vmem>>, vector<16x512xbf16>
    tpu.vector_store %arg7[%c16, %c0_18], %66 {strides = array<i32>} : memref<224x512xbf16, #tpu.memory_space<vmem>>, vector<16x512xbf16>,
    %c511_i32_19 = arith.constant 511 : i32
    %68 = tpu.dynamic_rotate %53 by %c511_i32_19 dim 1 : vector<8x512xf32>, i32 -> vector<8x512xf32>
    %69 = arith.mulf %68, %51 : vector<8x512xf32>
    %70 = tpu.concatenate %53, %69 in 0 : vector<8x512xf32>, vector<8x512xf32> -> vector<16x512xf32>
    %71 = arith.truncf %70 : vector<16x512xf32> to vector<16x512xbf16>
    %c32 = arith.constant 32 : index
    %c0_20 = arith.constant 0 : index
    %72 = vector.load %arg7[%c32, %c0_20] : memref<224x512xbf16, #tpu.memory_space<vmem>>, vector<16x512xbf16>
    tpu.vector_store %arg7[%c32, %c0_20], %71 {strides = array<i32>} : memref<224x512xbf16, #tpu.memory_space<vmem>>, vector<16x512xbf16>,
    %c504_i32 = arith.constant 504 : i32
    %73 = tpu.dynamic_rotate %53 by %c504_i32 dim 1 : vector<8x512xf32>, i32 -> vector<8x512xf32>
    %74 = arith.mulf %73, %39 : vector<8x512xf32>
    %c1_i32_21 = arith.constant 1 : i32
    %75 = tpu.dynamic_rotate %74 by %c1_i32_21 dim 1 : vector<8x512xf32>, i32 -> vector<8x512xf32>
    %76 = arith.mulf %75, %45 : vector<8x512xf32>
    %77 = tpu.concatenate %76, %74 in 0 : vector<8x512xf32>, vector<8x512xf32> -> vector<16x512xf32>
    %78 = arith.truncf %77 : vector<16x512xf32> to vector<16x512xbf16>
    %c48 = arith.constant 48 : index
    %c0_22 = arith.constant 0 : index
    %79 = vector.load %arg7[%c48, %c0_22] : memref<224x512xbf16, #tpu.memory_space<vmem>>, vector<16x512xbf16>
    tpu.vector_store %arg7[%c48, %c0_22], %78 {strides = array<i32>} : memref<224x512xbf16, #tpu.memory_space<vmem>>, vector<16x512xbf16>,
    %c511_i32_23 = arith.constant 511 : i32
    %80 = tpu.dynamic_rotate %74 by %c511_i32_23 dim 1 : vector<8x512xf32>, i32 -> vector<8x512xf32>
    %81 = arith.mulf %80, %51 : vector<8x512xf32>
    %c8_i32_24 = arith.constant 8 : i32
    %82 = tpu.dynamic_rotate %12 by %c8_i32_24 dim 1 : vector<8x512xf32>, i32 -> vector<8x512xf32>
    %83 = arith.mulf %82, %33 : vector<8x512xf32>
    %c1_i32_25 = arith.constant 1 : i32
    %84 = tpu.dynamic_rotate %83 by %c1_i32_25 dim 1 : vector<8x512xf32>, i32 -> vector<8x512xf32>
    %85 = arith.mulf %84, %45 : vector<8x512xf32>
    %86 = tpu.concatenate %81, %85 in 0 : vector<8x512xf32>, vector<8x512xf32> -> vector<16x512xf32>
    %87 = arith.truncf %86 : vector<16x512xf32> to vector<16x512xbf16>
    %c64 = arith.constant 64 : index
    %c0_26 = arith.constant 0 : index
    %88 = vector.load %arg7[%c64, %c0_26] : memref<224x512xbf16, #tpu.memory_space<vmem>>, vector<16x512xbf16>
    tpu.vector_store %arg7[%c64, %c0_26], %87 {strides = array<i32>} : memref<224x512xbf16, #tpu.memory_space<vmem>>, vector<16x512xbf16>,
    %c511_i32_27 = arith.constant 511 : i32
    %89 = tpu.dynamic_rotate %83 by %c511_i32_27 dim 1 : vector<8x512xf32>, i32 -> vector<8x512xf32>
    %90 = arith.mulf %89, %51 : vector<8x512xf32>
    %91 = tpu.concatenate %83, %90 in 0 : vector<8x512xf32>, vector<8x512xf32> -> vector<16x512xf32>
    %92 = arith.truncf %91 : vector<16x512xf32> to vector<16x512xbf16>
    %c80 = arith.constant 80 : index
    %c0_28 = arith.constant 0 : index
    %93 = vector.load %arg7[%c80, %c0_28] : memref<224x512xbf16, #tpu.memory_space<vmem>>, vector<16x512xbf16>
    tpu.vector_store %arg7[%c80, %c0_28], %92 {strides = array<i32>} : memref<224x512xbf16, #tpu.memory_space<vmem>>, vector<16x512xbf16>,
    %c1_i32_29 = arith.constant 1 : i32
    %94 = tpu.dynamic_rotate %12 by %c1_i32_29 dim 1 : vector<8x512xf32>, i32 -> vector<8x512xf32>
    %95 = arith.mulf %94, %45 : vector<8x512xf32>
    %96 = tpu.concatenate %95, %12 in 0 : vector<8x512xf32>, vector<8x512xf32> -> vector<16x512xf32>
    %97 = arith.truncf %96 : vector<16x512xf32> to vector<16x512xbf16>
    %c96 = arith.constant 96 : index
    %c0_30 = arith.constant 0 : index
    %98 = vector.load %arg7[%c96, %c0_30] : memref<224x512xbf16, #tpu.memory_space<vmem>>, vector<16x512xbf16>
    tpu.vector_store %arg7[%c96, %c0_30], %97 {strides = array<i32>} : memref<224x512xbf16, #tpu.memory_space<vmem>>, vector<16x512xbf16>,
    %c511_i32_31 = arith.constant 511 : i32
    %99 = tpu.dynamic_rotate %12 by %c511_i32_31 dim 1 : vector<8x512xf32>, i32 -> vector<8x512xf32>
    %100 = arith.mulf %99, %51 : vector<8x512xf32>
    %c504_i32_32 = arith.constant 504 : i32
    %101 = tpu.dynamic_rotate %12 by %c504_i32_32 dim 1 : vector<8x512xf32>, i32 -> vector<8x512xf32>
    %102 = arith.mulf %101, %39 : vector<8x512xf32>
    %c1_i32_33 = arith.constant 1 : i32
    %103 = tpu.dynamic_rotate %102 by %c1_i32_33 dim 1 : vector<8x512xf32>, i32 -> vector<8x512xf32>
    %104 = arith.mulf %103, %45 : vector<8x512xf32>
    %105 = tpu.concatenate %100, %104 in 0 : vector<8x512xf32>, vector<8x512xf32> -> vector<16x512xf32>
    %106 = arith.truncf %105 : vector<16x512xf32> to vector<16x512xbf16>
    %c112 = arith.constant 112 : index
    %c0_34 = arith.constant 0 : index
    %107 = vector.load %arg7[%c112, %c0_34] : memref<224x512xbf16, #tpu.memory_space<vmem>>, vector<16x512xbf16>
    tpu.vector_store %arg7[%c112, %c0_34], %106 {strides = array<i32>} : memref<224x512xbf16, #tpu.memory_space<vmem>>, vector<16x512xbf16>,
    %c511_i32_35 = arith.constant 511 : i32
    %108 = tpu.dynamic_rotate %102 by %c511_i32_35 dim 1 : vector<8x512xf32>, i32 -> vector<8x512xf32>
    %109 = arith.mulf %108, %51 : vector<8x512xf32>
    %110 = tpu.concatenate %102, %109 in 0 : vector<8x512xf32>, vector<8x512xf32> -> vector<16x512xf32>
    %111 = arith.truncf %110 : vector<16x512xf32> to vector<16x512xbf16>
    %c128 = arith.constant 128 : index
    %c0_36 = arith.constant 0 : index
    %112 = vector.load %arg7[%c128, %c0_36] : memref<224x512xbf16, #tpu.memory_space<vmem>>, vector<16x512xbf16>
    tpu.vector_store %arg7[%c128, %c0_36], %111 {strides = array<i32>} : memref<224x512xbf16, #tpu.memory_space<vmem>>, vector<16x512xbf16>,
    %c448_i32 = arith.constant 448 : i32
    %113 = tpu.dynamic_rotate %12 by %c448_i32 dim 1 : vector<8x512xf32>, i32 -> vector<8x512xf32>
    %114 = arith.mulf %113, %27 : vector<8x512xf32>
    %c8_i32_37 = arith.constant 8 : i32
    %115 = tpu.dynamic_rotate %114 by %c8_i32_37 dim 1 : vector<8x512xf32>, i32 -> vector<8x512xf32>
    %116 = arith.mulf %115, %33 : vector<8x512xf32>
    %c1_i32_38 = arith.constant 1 : i32
    %117 = tpu.dynamic_rotate %116 by %c1_i32_38 dim 1 : vector<8x512xf32>, i32 -> vector<8x512xf32>
    %118 = arith.mulf %117, %45 : vector<8x512xf32>
    %119 = tpu.concatenate %118, %116 in 0 : vector<8x512xf32>, vector<8x512xf32> -> vector<16x512xf32>
    %120 = arith.truncf %119 : vector<16x512xf32> to vector<16x512xbf16>
    %c144 = arith.constant 144 : index
    %c0_39 = arith.constant 0 : index
    %121 = vector.load %arg7[%c144, %c0_39] : memref<224x512xbf16, #tpu.memory_space<vmem>>, vector<16x512xbf16>
    tpu.vector_store %arg7[%c144, %c0_39], %120 {strides = array<i32>} : memref<224x512xbf16, #tpu.memory_space<vmem>>, vector<16x512xbf16>,
    %c511_i32_40 = arith.constant 511 : i32
    %122 = tpu.dynamic_rotate %116 by %c511_i32_40 dim 1 : vector<8x512xf32>, i32 -> vector<8x512xf32>
    %123 = arith.mulf %122, %51 : vector<8x512xf32>
    %c1_i32_41 = arith.constant 1 : i32
    %124 = tpu.dynamic_rotate %114 by %c1_i32_41 dim 1 : vector<8x512xf32>, i32 -> vector<8x512xf32>
    %125 = arith.mulf %124, %45 : vector<8x512xf32>
    %126 = tpu.concatenate %123, %125 in 0 : vector<8x512xf32>, vector<8x512xf32> -> vector<16x512xf32>
    %127 = arith.truncf %126 : vector<16x512xf32> to vector<16x512xbf16>
    %c160 = arith.constant 160 : index
    %c0_42 = arith.constant 0 : index
    %128 = vector.load %arg7[%c160, %c0_42] : memref<224x512xbf16, #tpu.memory_space<vmem>>, vector<16x512xbf16>
    tpu.vector_store %arg7[%c160, %c0_42], %127 {strides = array<i32>} : memref<224x512xbf16, #tpu.memory_space<vmem>>, vector<16x512xbf16>,
    %c511_i32_43 = arith.constant 511 : i32
    %129 = tpu.dynamic_rotate %114 by %c511_i32_43 dim 1 : vector<8x512xf32>, i32 -> vector<8x512xf32>
    %130 = arith.mulf %129, %51 : vector<8x512xf32>
    %131 = tpu.concatenate %114, %130 in 0 : vector<8x512xf32>, vector<8x512xf32> -> vector<16x512xf32>
    %132 = arith.truncf %131 : vector<16x512xf32> to vector<16x512xbf16>
    %c176 = arith.constant 176 : index
    %c0_44 = arith.constant 0 : index
    %133 = vector.load %arg7[%c176, %c0_44] : memref<224x512xbf16, #tpu.memory_space<vmem>>, vector<16x512xbf16>
    tpu.vector_store %arg7[%c176, %c0_44], %132 {strides = array<i32>} : memref<224x512xbf16, #tpu.memory_space<vmem>>, vector<16x512xbf16>,
    %c504_i32_45 = arith.constant 504 : i32
    %134 = tpu.dynamic_rotate %114 by %c504_i32_45 dim 1 : vector<8x512xf32>, i32 -> vector<8x512xf32>
    %135 = arith.mulf %134, %39 : vector<8x512xf32>
    %c1_i32_46 = arith.constant 1 : i32
    %136 = tpu.dynamic_rotate %135 by %c1_i32_46 dim 1 : vector<8x512xf32>, i32 -> vector<8x512xf32>
    %137 = arith.mulf %136, %45 : vector<8x512xf32>
    %138 = tpu.concatenate %137, %135 in 0 : vector<8x512xf32>, vector<8x512xf32> -> vector<16x512xf32>
    %139 = arith.truncf %138 : vector<16x512xf32> to vector<16x512xbf16>
    %c192 = arith.constant 192 : index
    %c0_47 = arith.constant 0 : index
    %140 = vector.load %arg7[%c192, %c0_47] : memref<224x512xbf16, #tpu.memory_space<vmem>>, vector<16x512xbf16>
    tpu.vector_store %arg7[%c192, %c0_47], %139 {strides = array<i32>} : memref<224x512xbf16, #tpu.memory_space<vmem>>, vector<16x512xbf16>,
    %c511_i32_48 = arith.constant 511 : i32
    %141 = tpu.dynamic_rotate %135 by %c511_i32_48 dim 1 : vector<8x512xf32>, i32 -> vector<8x512xf32>
    %142 = arith.mulf %141, %51 : vector<8x512xf32>
    %cst_49 = arith.constant 0.000000e+00 : f32
    %143 = vector.broadcast %cst_49 : f32 to vector<8x512xf32>
    %144 = tpu.concatenate %142, %143 in 0 : vector<8x512xf32>, vector<8x512xf32> -> vector<16x512xf32>
    %145 = arith.truncf %144 : vector<16x512xf32> to vector<16x512xbf16>
    %c208 = arith.constant 208 : index
    %c0_50 = arith.constant 0 : index
    %146 = vector.load %arg7[%c208, %c0_50] : memref<224x512xbf16, #tpu.memory_space<vmem>>, vector<16x512xbf16>
    tpu.vector_store %arg7[%c208, %c0_50], %145 {strides = array<i32>} : memref<224x512xbf16, #tpu.memory_space<vmem>>, vector<16x512xbf16>,
    %c0_51 = arith.constant 0 : index
    %c0_52 = arith.constant 0 : index
    %147 = vector.load %arg4[%c0_51, %c0_52] : memref<16x224xbf16, #tpu.memory_space<vmem>>, vector<16x224xbf16>
    %c0_53 = arith.constant 0 : index
    %c0_54 = arith.constant 0 : index
    %148 = vector.load %arg7[%c0_53, %c0_54] : memref<224x512xbf16, #tpu.memory_space<vmem>>, vector<224x512xbf16>
    %cst_55 = arith.constant dense<0.000000e+00> : vector<16x512xf32>
    %149 = tpu.matmul %147, %148, %cst_55 {dimension_numbers = #tpu.dot_dimension_numbers<[1], [0], [0], [1], [0, 0, 1, 1], [], []>} : vector<16x224xbf16>, vector<224x512xbf16>, vector<16x512xf32> -> vector<16x512xf32>
    %c0_56 = arith.constant 0 : index
    %c0_57 = arith.constant 0 : index
    %c0_58 = arith.constant 0 : index
    %150 = vector.load %arg6[%c0_56, %c0_57, %c0_58] : memref<1x16x512xf32, #tpu.memory_space<vmem>>, vector<1x16x512xf32>
    %151 = vector.shape_cast %150 : vector<1x16x512xf32> to vector<16x512xf32>
    %152 = vector.shape_cast %149 : vector<16x512xf32> to vector<1x16x512xf32>
    tpu.vector_store %arg6[%c0_56, %c0_57, %c0_58], %152 {strides = array<i32>} : memref<1x16x512xf32, #tpu.memory_space<vmem>>, vector<1x16x512xf32>,
    return
  }
  func.func @transform_0(%arg0: i32) -> (i32, i32, i32) {
    %c0_i32 = arith.constant 0 : i32
    %c0_i32_0 = arith.constant 0 : i32
    %c0_i32_1 = arith.constant 0 : i32
    return %arg0, %c0_i32, %c0_i32_0 : i32, i32, i32
  }
  func.func @transform_1(%arg0: i32) -> (i32, i32) {
    %c0_i32 = arith.constant 0 : i32
    %c0_i32_0 = arith.constant 0 : i32
    %c0_i32_1 = arith.constant 0 : i32
    return %c0_i32, %c0_i32_0 : i32, i32
  }
  func.func @transform_2(%arg0: i32) -> (i32, i32) {
    %c0_i32 = arith.constant 0 : i32
    %c0_i32_0 = arith.constant 0 : i32
    %c0_i32_1 = arith.constant 0 : i32
    return %c0_i32, %c0_i32_0 : i32, i32
  }
  func.func @transform_3(%arg0: i32) -> (i32, i32) {
    %c0_i32 = arith.constant 0 : i32
    %c0_i32_0 = arith.constant 0 : i32
    %c0_i32_1 = arith.constant 0 : i32
    return %c0_i32, %c0_i32_0 : i32, i32
  }
  func.func @transform_4(%arg0: i32) -> (i32, i32) {
    %c0_i32 = arith.constant 0 : i32
    %c0_i32_0 = arith.constant 0 : i32
    %c0_i32_1 = arith.constant 0 : i32
    return %c0_i32, %c0_i32_0 : i32, i32
  }
  func.func @transform_5(%arg0: i32) -> (i32, i32, i32) {
    %c0_i32 = arith.constant 0 : i32
    %c0_i32_0 = arith.constant 0 : i32
    %c0_i32_1 = arith.constant 0 : i32
    return %arg0, %c0_i32, %c0_i32_0 : i32, i32, i32
  }
}

</mosaic_0001>

<llo_original>
// kernel: tpu_custom_call.1
$region0: #{tpu_custom_call.1}
  #allocation0 [shape = 'u32[]', space=smem, size = 0x4, offset = 0x4, fixed_abs, tag = 'smem constant byte address 0x4 - core index']
  #allocation1 [shape = 'u32[144,128]{1,0:T(1,128)}', space=vmem, size = 0x12000, scoped, tag = 'internal scratch']
  #allocation2 [shape = 'bf16[224,512]{1,0:T(16,128)(2,1)}', space=vmem, size = 0x38000, scoped, tag = 'scratch operand']
  %s0 = inlined_call_operand.hbm [shape: f32[4,8,512], index: 0, kind: input, shape index: {}]
  %s1 = inlined_call_operand.vmem [shape: f32[8,1], index: 1, kind: input, shape index: {}]
  %s2 = inlined_call_operand.vmem [shape: f32[8,1], index: 2, kind: input, shape index: {}]
  %s3 = inlined_call_operand.vmem [shape: bf16[16,224], index: 3, kind: input, shape index: {}]
  %s4 = inlined_call_operand.vmem [shape: s32[3,512], index: 4, kind: input, shape index: {}]
  %s5 = inlined_call_operand.hbm [shape: f32[4,16,512], index: 5, kind: output, shape index: {}]
  %s6 = sld [smem:[#allocation0]]
  $region57: #{tpu_custom_call.1} parent=0
    _
  %s8 = ssub.s32 1, %s6
  %s9 = scalar_select 0, %s8, %s6
  $region1: #{tpu_custom_call.1} parent=0
    #allocation3 [shape = 'u8[32768]{0}', space=vmem, size = 0x8000, scoped, tag = 'input window, operand 0']
    #allocation4 [shape = 's32[2]{0}', space=sflag, size = 0x8, scoped, tag = 'scoped memory for tpu_custom_call.1']
    #allocation5 [shape = 's32[2]{0}', space=sflag, size = 0x8, scoped, tag = 'scoped memory for tpu_custom_call.1']
    #allocation6 [shape = 'u8[65536]{0}', space=vmem, size = 0x10000, scoped, tag = 'output window, operand 0']
    %10 = vsyncpa [#allocation4], 0
    %s11 = scalar_lea.sflag [#allocation4], 1
    %12 = vsyncpa %s11, 0
    %13 = vsyncpa [#allocation5], 0
    %s14 = scalar_lea.sflag [#allocation5], 1
    %15 = vsyncpa %s14, 0
    loop: start=0, step=1, limit=6
    $region2: #{tpu_custom_call.1} parent=1 // loop_pre_header
      _
    $region3: #{tpu_custom_call.1} parent=1 // loop_header
      %s17 = sphi 0, %s21
      %p18 = scmp.ge.s32.totalorder %s17, 6
      %s27 = sphi 0, %s29
      %s30 = sphi 0, %s27
      %s31 = sphi 0, %s30
      %s47 = sphi 0, %s31
      %s51 = sphi 0, %s51
      %s53 = sphi 0, %s51
      %s54 = sphi 0, %s53
      %s68 = sphi 0, %s54
      %s72 = sphi 0, %s72
      %s74 = sphi 0, %s72
      %s75 = sphi 0, %s74
      %s89 = sphi 0, %s75
      %s93 = sphi 0, %s93
      %s95 = sphi 0, %s93
      %s96 = sphi 0, %s95
      %s110 = sphi 0, %s96
      %s114 = sphi 0, %s114
      %s116 = sphi 0, %s114
      %s117 = sphi 0, %s116
      %s131 = sphi 0, %s117
      %s137 = sphi 0, %s139
      %s140 = sphi 0, %s137
      %s141 = sphi 0, %s140
      %s157 = sphi 0, %s141
    $region4: #{tpu_custom_call.1} parent=1 // loop_header_branch
      %20 = sbr.rel (%p18) target = $region8
    $region5: #{tpu_custom_call.1} parent=1 // loop_body
      %s22 = ssub.s32 %s17, 1
      %s23 = ssub.s32 %s17, 2
      %s24 = sadd.s32 %s17, 1
      %s25 = ssub.s32 %s17, %s24
      %p26 = scmp.eq.s32.totalorder %s25, 0
      %s28 = sadd.s32 %s27, 1
      %s29 = scalar_select %p26, %s27, %s28
      %p32 = pneg %p26
      %p33 = scmp.eq.s32.totalorder %s17, 3
      %p34 = por %p32, %p33
      %p35 = scmp.ne.s32.totalorder %s27, %s30
      %p36 = scmp.eq.s32.totalorder %s17, 0
      %p37 = por %p35, %p36
      %p38 = scmp.ne.s32.totalorder %s27, %s30
      %p39 = scmp.eq.s32.totalorder %s22, 3
      %p40 = por %p38, %p39
      %p41 = scmp.ne.s32.totalorder %s30, %s31
      %p42 = scmp.eq.s32.totalorder %s22, 0
      %p43 = por %p41, %p42
      %p44 = scmp.ne.s32.totalorder %s30, %s31
      %p45 = scmp.eq.s32.totalorder %s23, 3
      %p46 = por %p44, %p45
      %p48 = scmp.ne.s32.totalorder %s31, %s47
      %p49 = scmp.eq.s32.totalorder %s23, 0
      %p50 = por %p48, %p49
      %s52 = sadd.s32 %s51, 1
      %p55 = scmp.eq.s32.totalorder %s17, 3
      %p56 = scmp.ne.s32.totalorder %s51, %s53
      %p57 = scmp.eq.s32.totalorder %s17, 0
      %p58 = por %p56, %p57
      %p59 = scmp.ne.s32.totalorder %s51, %s53
      %p60 = scmp.eq.s32.totalorder %s22, 3
      %p61 = por %p59, %p60
      %p62 = scmp.ne.s32.totalorder %s53, %s54
      %p63 = scmp.eq.s32.totalorder %s22, 0
      %p64 = por %p62, %p63
      %p65 = scmp.ne.s32.totalorder %s53, %s54
      %p66 = scmp.eq.s32.totalorder %s23, 3
      %p67 = por %p65, %p66
      %p69 = scmp.ne.s32.totalorder %s54, %s68
      %p70 = scmp.eq.s32.totalorder %s23, 0
      %p71 = por %p69, %p70
      %s73 = sadd.s32 %s72, 1
      %p76 = scmp.eq.s32.totalorder %s17, 3
      %p77 = scmp.ne.s32.totalorder %s72, %s74
      %p78 = scmp.eq.s32.totalorder %s17, 0
      %p79 = por %p77, %p78
      %p80 = scmp.ne.s32.totalorder %s72, %s74
      %p81 = scmp.eq.s32.totalorder %s22, 3
      %p82 = por %p80, %p81
      %p83 = scmp.ne.s32.totalorder %s74, %s75
      %p84 = scmp.eq.s32.totalorder %s22, 0
      %p85 = por %p83, %p84
      %p86 = scmp.ne.s32.totalorder %s74, %s75
      %p87 = scmp.eq.s32.totalorder %s23, 3
      %p88 = por %p86, %p87
      %p90 = scmp.ne.s32.totalorder %s75, %s89
      %p91 = scmp.eq.s32.totalorder %s23, 0
      %p92 = por %p90, %p91
      %s94 = sadd.s32 %s93, 1
      %p97 = scmp.eq.s32.totalorder %s17, 3
      %p98 = scmp.ne.s32.totalorder %s93, %s95
      %p99 = scmp.eq.s32.totalorder %s17, 0
      %p100 = por %p98, %p99
      %p101 = scmp.ne.s32.totalorder %s93, %s95
      %p102 = scmp.eq.s32.totalorder %s22, 3
      %p103 = por %p101, %p102
      %p104 = scmp.ne.s32.totalorder %s95, %s96
      %p105 = scmp.eq.s32.totalorder %s22, 0
      %p106 = por %p104, %p105
      %p107 = scmp.ne.s32.totalorder %s95, %s96
      %p108 = scmp.eq.s32.totalorder %s23, 3
      %p109 = por %p107, %p108
      %p111 = scmp.ne.s32.totalorder %s96, %s110
      %p112 = scmp.eq.s32.totalorder %s23, 0
      %p113 = por %p111, %p112
      %s115 = sadd.s32 %s114, 1
      %p118 = scmp.eq.s32.totalorder %s17, 3
      %p119 = scmp.ne.s32.totalorder %s114, %s116
      %p120 = scmp.eq.s32.totalorder %s17, 0
      %p121 = por %p119, %p120
      %p122 = scmp.ne.s32.totalorder %s114, %s116
      %p123 = scmp.eq.s32.totalorder %s22, 3
      %p124 = por %p122, %p123
      %p125 = scmp.ne.s32.totalorder %s116, %s117
      %p126 = scmp.eq.s32.totalorder %s22, 0
      %p127 = por %p125, %p126
      %p128 = scmp.ne.s32.totalorder %s116, %s117
      %p129 = scmp.eq.s32.totalorder %s23, 3
      %p130 = por %p128, %p129
      %p132 = scmp.ne.s32.totalorder %s117, %s131
      %p133 = scmp.eq.s32.totalorder %s23, 0
      %p134 = por %p132, %p133
      %s135 = ssub.s32 %s17, %s24
      %p136 = scmp.eq.s32.totalorder %s135, 0
      %s138 = sadd.s32 %s137, 1
      %s139 = scalar_select %p136, %s137, %s138
      %p142 = pneg %p136
      %p143 = scmp.eq.s32.totalorder %s17, 3
      %p144 = por %p142, %p143
      %p145 = scmp.ne.s32.totalorder %s137, %s140
      %p146 = scmp.eq.s32.totalorder %s17, 0
      %p147 = por %p145, %p146
      %p148 = scmp.ne.s32.totalorder %s137, %s140
      %p149 = scmp.eq.s32.totalorder %s22, 3
      %p150 = por %p148, %p149
      %p151 = scmp.ne.s32.totalorder %s140, %s141
      %p152 = scmp.eq.s32.totalorder %s22, 0
      %p153 = por %p151, %p152
      %p154 = scmp.ne.s32.totalorder %s140, %s141
      %p155 = scmp.eq.s32.totalorder %s23, 3
      %p156 = por %p154, %p155
      %p158 = scmp.ne.s32.totalorder %s141, %s157
      %p159 = scmp.eq.s32.totalorder %s23, 0
      %p160 = por %p158, %p159
      %p161 = scmp.le.s32.totalorder 1, %s17
      %p162 = scmp.lt.s32.totalorder %s17, 5
      %p163 = pnand %p161, %p162
      %p164 = pneg %p163
      // Predicated region
      $region9: #{tpu_custom_call.1} parent=5 // pred_check
        _
      $region10: #{tpu_custom_call.1} parent=5 // pred_check_branch
        %166 = sbr.rel (%p163) target = $region12
      $region11: #{tpu_custom_call.1} parent=5 // pred_region
        %s167 = ssub.s32 %s17, 1
        // Predicated region
        $region13: #{tpu_custom_call.1} parent=11 // pred_check
          %p168 = pneg %p64
        $region14: #{tpu_custom_call.1} parent=11 // pred_check_branch
          %170 = sbr.rel (%p168) target = $region16
        $region15: #{tpu_custom_call.1} parent=11 // pred_region
          _
        $region16: #{tpu_custom_call.1} parent=11 // pred_fallthru
          _
        // Predicated region
        $region17: #{tpu_custom_call.1} parent=11 // pred_check
          %p171 = pneg %p85
        $region18: #{tpu_custom_call.1} parent=11 // pred_check_branch
          %173 = sbr.rel (%p171) target = $region20
        $region19: #{tpu_custom_call.1} parent=11 // pred_region
          _
        $region20: #{tpu_custom_call.1} parent=11 // pred_fallthru
          _
        // Predicated region
        $region21: #{tpu_custom_call.1} parent=11 // pred_check
          %p174 = pneg %p106
        $region22: #{tpu_custom_call.1} parent=11 // pred_check_branch
          %176 = sbr.rel (%p174) target = $region24
        $region23: #{tpu_custom_call.1} parent=11 // pred_region
          _
        $region24: #{tpu_custom_call.1} parent=11 // pred_fallthru
          _
        // Predicated region
        $region25: #{tpu_custom_call.1} parent=11 // pred_check
          %p177 = pneg %p127
        $region26: #{tpu_custom_call.1} parent=11 // pred_check_branch
          %179 = sbr.rel (%p177) target = $region28
        $region27: #{tpu_custom_call.1} parent=11 // pred_region
          _
        $region28: #{tpu_custom_call.1} parent=11 // pred_fallthru
          _
      $region12: #{tpu_custom_call.1} parent=5 // pred_fallthru
        _
      %p180 = scmp.lt.s32.totalorder %s17, 4
      // Predicated region
      $region29: #{tpu_custom_call.1} parent=5 // pred_check
        %p181 = pneg %p180
      $region30: #{tpu_custom_call.1} parent=5 // pred_check_branch
        %183 = sbr.rel (%p181) target = $region32
      $region31: #{tpu_custom_call.1} parent=5 // pred_region
        // Predicated region
        $region33: #{tpu_custom_call.1} parent=31 // pred_check
          %p184 = pneg %p37
        $region34: #{tpu_custom_call.1} parent=31 // pred_check_branch
          %186 = sbr.rel (%p184) target = $region36
        $region35: #{tpu_custom_call.1} parent=31 // pred_region
          %s187 = sand.u32 %s27, 1
          %s188 = scalar_lea.sflag [#allocation4], %s187
          %s189 = sand.u32 %s27, 1
          %s190 = smul.addr %s189, 32
          %s191 = scalar_lea.vmem [#allocation3], %s190
          %s193 = ssub.s32 512, 512
          %194 = vsyncadd %s188, %s193
          %s195 = smul.addr %s17, 4
          %s196 = smul.addr %s195, 128
          %s197 = scalar_lea.hbm %s0, %s196
          %s199 = sshll.u32 %s191, 4
          %s200 = int_to_ptr.vmem [resolvable:$true] %s199
          %202 = dma.hbm_to_vmem [thread:$0]  %s197, 512, %s200, %s188
        $region36: #{tpu_custom_call.1} parent=31 // pred_fallthru
          _
      $region32: #{tpu_custom_call.1} parent=5 // pred_fallthru
        _
      %p203 = scmp.le.s32.totalorder 1, %s17
      %p204 = scmp.lt.s32.totalorder %s17, 5
      %p205 = pnand %p203, %p204
      %p206 = pneg %p205
      // Predicated region
      $region37: #{tpu_custom_call.1} parent=5 // pred_check
        _
      $region38: #{tpu_custom_call.1} parent=5 // pred_check_branch
        %208 = sbr.rel (%p205) target = $region40
      $region39: #{tpu_custom_call.1} parent=5 // pred_region
        %s209 = ssub.s32 %s17, 1
        %s210 = sand.u32 %s30, 1
        %s211 = scalar_lea.sflag [#allocation4], %s210
        %s212 = sand.u32 %s30, 1
        %s213 = smul.addr %s212, 32
        %s214 = scalar_lea.vmem [#allocation3], %s213
        // Predicated region
        $region41: #{tpu_custom_call.1} parent=39 // pred_check
          %p215 = pneg %p43
        $region42: #{tpu_custom_call.1} parent=39 // pred_check_branch
          %217 = sbr.rel (%p215) target = $region44
        $region43: #{tpu_custom_call.1} parent=39 // pred_region
          %218 = dma.done %s211, 512
        $region44: #{tpu_custom_call.1} parent=39 // pred_fallthru
          _
        %s219 = sand.u32 %s30, 1
        %s220 = scalar_lea.sflag [#allocation4], %s219
        %s221 = sand.u32 %s30, 1
        %s222 = smul.addr %s221, 32
        %s223 = scalar_lea.vmem [#allocation3], %s222
        %p224 = pneg %p43
        %p225 = pneg %p40
        %p226 = pneg %p64
        %p227 = pneg %p61
        %p228 = pneg %p85
        %p229 = pneg %p82
        %p230 = pneg %p106
        %p231 = pneg %p103
        %p232 = pneg %p127
        %p233 = pneg %p124
        %p234 = pneg %p153
        %p235 = pneg %p150
        %s236 = sand.u32 %s140, 1
        %s237 = scalar_lea.sflag [#allocation5], %s236
        %s238 = sand.u32 %s140, 1
        %s239 = smul.addr %s238, 64
        %s240 = scalar_lea.vmem [#allocation6], %s239
        %v242 = vld [vmem:[%s214] sm:$0xff]
        %v243 = vld [vmem:[%s214 + $0x8] sm:$0xff]
        %v244 = vld [vmem:[%s214 + $0x10] sm:$0xff]
        %v245 = vld [vmem:[%s214 + $0x18] sm:$0xff]
        %v246 = vld [vmem:[%s1] sm:$0xff]
        %248 = vset.pattern.permute.xlu0 0
        %249 = vperm.xlu0 %248, %v246
        %v250 = vpop.permute.xlu0 %249
        %v252 = vmul.f32 %v242, %v250
        %v253 = vmul.f32 %v243, %v250
        %v254 = vmul.f32 %v244, %v250
        %v255 = vmul.f32 %v245, %v250
        %v256 = vld [vmem:[%s2] sm:$0xff]
        %258 = vset.pattern.permute.xlu0 0
        %259 = vperm.xlu0 %258, %v256
        %v260 = vpop.permute.xlu0 %259
        %v262 = vadd.f32 %v252, %v260
        %v263 = vadd.f32 %v253, %v260
        %v264 = vadd.f32 %v254, %v260
        %v265 = vadd.f32 %v255, %v260
        %v266 = vxor.u32 %v262, 2147483648
        %v267 = vxor.u32 %v263, 2147483648
        %v268 = vxor.u32 %v264, 2147483648
        %v269 = vxor.u32 %v265, 2147483648
        %v270 = vmul.f32 %v266, 1.442695
        %v271 = vpow.pop %v270
        %v272 = vmul.f32 %v267, 1.442695
        %v273 = vpow.pop %v272
        %v274 = vmul.f32 %v268, 1.442695
        %v275 = vpow.pop %v274
        %v276 = vmul.f32 %v269, 1.442695
        %v277 = vpow.pop %v276
        %v278 = vadd.f32 %v271, 1.0
        %v279 = vadd.f32 %v273, 1.0
        %v280 = vadd.f32 %v275, 1.0
        %v281 = vadd.f32 %v277, 1.0
        %v282 = vrcp.pop %v278
        %v283 = vmul.f32 1.0, %v282
        %v284 = vrcp.pop %v279
        %v285 = vmul.f32 1.0, %v284
        %v286 = vrcp.pop %v280
        %v287 = vmul.f32 1.0, %v286
        %v288 = vrcp.pop %v281
        %v289 = vmul.f32 1.0, %v288
        %v290 = vld [vmem:[%s4] ss:$4 sm:$0xf]
        %s291 = scalar_lea.vmem %s4, 1
        %v292 = vld [vmem:[%s291] ss:$4 sm:$0xf]
        %s293 = scalar_lea.vmem %s4, 2
        %v294 = vld [vmem:[%s293] ss:$4 sm:$0xf]
        %vm295 = vcmp.ge.s32.totalorder %v290, 1
        %v296 = vsel %vm295, 1, 0
        %v297 = vcvt.s32.f32 %v296
        %v299 = vlaneseq
        %v300 = vshrl.u32 %v299, 7
        %v301 = vsub.s32 0, %v300
        %v302 = vrot.slane %v297, %v301
        %v303 = vlaneseq
        %v304 = vshrl.u32 %v303, 7
        %v305 = vsub.s32 1, %v304
        %v306 = vrot.slane %v297, %v305
        %v307 = vlaneseq
        %v308 = vshrl.u32 %v307, 7
        %v309 = vsub.s32 2, %v308
        %v310 = vrot.slane %v297, %v309
        %v311 = vlaneseq
        %v312 = vshrl.u32 %v311, 7
        %v313 = vsub.s32 3, %v312
        %v314 = vrot.slane %v297, %v313
        %vm319 = vcmp.le.s32.totalorder %v290, 6
        %v320 = vsel %vm319, 1, 0
        %v321 = vcvt.s32.f32 %v320
        %v323 = vlaneseq
        %v324 = vshrl.u32 %v323, 7
        %v325 = vsub.s32 0, %v324
        %v326 = vrot.slane %v321, %v325
        %v327 = vlaneseq
        %v328 = vshrl.u32 %v327, 7
        %v329 = vsub.s32 1, %v328
        %v330 = vrot.slane %v321, %v329
        %v331 = vlaneseq
        %v332 = vshrl.u32 %v331, 7
        %v333 = vsub.s32 2, %v332
        %v334 = vrot.slane %v321, %v333
        %v335 = vlaneseq
        %v336 = vshrl.u32 %v335, 7
        %v337 = vsub.s32 3, %v336
        %v338 = vrot.slane %v321, %v337
        %vm343 = vcmp.ge.s32.totalorder %v292, 1
        %v344 = vsel %vm343, 1, 0
        %v345 = vcvt.s32.f32 %v344
        %v347 = vlaneseq
        %v348 = vshrl.u32 %v347, 7
        %v349 = vsub.s32 0, %v348
        %v350 = vrot.slane %v345, %v349
        %v351 = vlaneseq
        %v352 = vshrl.u32 %v351, 7
        %v353 = vsub.s32 1, %v352
        %v354 = vrot.slane %v345, %v353
        %v355 = vlaneseq
        %v356 = vshrl.u32 %v355, 7
        %v357 = vsub.s32 2, %v356
        %v358 = vrot.slane %v345, %v357
        %v359 = vlaneseq
        %v360 = vshrl.u32 %v359, 7
        %v361 = vsub.s32 3, %v360
        %v362 = vrot.slane %v345, %v361
        %vm367 = vcmp.le.s32.totalorder %v292, 6
        %v368 = vsel %vm367, 1, 0
        %v369 = vcvt.s32.f32 %v368
        %v371 = vlaneseq
        %v372 = vshrl.u32 %v371, 7
        %v373 = vsub.s32 0, %v372
        %v374 = vrot.slane %v369, %v373
        %v375 = vlaneseq
        %v376 = vshrl.u32 %v375, 7
        %v377 = vsub.s32 1, %v376
        %v378 = vrot.slane %v369, %v377
        %v379 = vlaneseq
        %v380 = vshrl.u32 %v379, 7
        %v381 = vsub.s32 2, %v380
        %v382 = vrot.slane %v369, %v381
        %v383 = vlaneseq
        %v384 = vshrl.u32 %v383, 7
        %v385 = vsub.s32 3, %v384
        %v386 = vrot.slane %v369, %v385
        %vm391 = vcmp.ge.s32.totalorder %v294, 1
        %v392 = vsel %vm391, 1, 0
        %v393 = vcvt.s32.f32 %v392
        %v395 = vlaneseq
        %v396 = vshrl.u32 %v395, 7
        %v397 = vsub.s32 0, %v396
        %v398 = vrot.slane %v393, %v397
        %v399 = vlaneseq
        %v400 = vshrl.u32 %v399, 7
        %v401 = vsub.s32 1, %v400
        %v402 = vrot.slane %v393, %v401
        %v403 = vlaneseq
        %v404 = vshrl.u32 %v403, 7
        %v405 = vsub.s32 2, %v404
        %v406 = vrot.slane %v393, %v405
        %v407 = vlaneseq
        %v408 = vshrl.u32 %v407, 7
        %v409 = vsub.s32 3, %v408
        %v410 = vrot.slane %v393, %v409
        %vm415 = vcmp.le.s32.totalorder %v294, 6
        %v416 = vsel %vm415, 1, 0
        %v417 = vcvt.s32.f32 %v416
        %v419 = vlaneseq
        %v420 = vshrl.u32 %v419, 7
        %v421 = vsub.s32 0, %v420
        %v422 = vrot.slane %v417, %v421
        %v423 = vlaneseq
        %v424 = vshrl.u32 %v423, 7
        %v425 = vsub.s32 1, %v424
        %v426 = vrot.slane %v417, %v425
        %v427 = vlaneseq
        %v428 = vshrl.u32 %v427, 7
        %v429 = vsub.s32 2, %v428
        %v430 = vrot.slane %v417, %v429
        %v431 = vlaneseq
        %v432 = vshrl.u32 %v431, 7
        %v433 = vsub.s32 3, %v432
        %v434 = vrot.slane %v417, %v433
        %439 = vrot.lane.b32.xlu0 %v283, 64
        %v440 = vpop.permute.xlu0 %439
        %441 = vrot.lane.b32.xlu0 %v285, 64
        %v442 = vpop.permute.xlu0 %441
        %443 = vrot.lane.b32.xlu0 %v287, 64
        %v444 = vpop.permute.xlu0 %443
        %445 = vrot.lane.b32.xlu0 %v289, 64
        %v446 = vpop.permute.xlu0 %445
        %v447 = vlaneseq
        %v448 = vand.u32 %v447, 127
        %vm449 = vcmp.lt.s32.totalorder %v448, 64
        %v450 = vsel %vm449, %v444, %v446
        %v451 = vsel %vm449, %v442, %v444
        %v452 = vsel %vm449, %v440, %v442
        %v453 = vsel %vm449, %v446, %v440
        %v454 = vmul.f32 %v453, %v302
        %v455 = vmul.f32 %v452, %v306
        %v456 = vmul.f32 %v451, %v310
        %v457 = vmul.f32 %v450, %v314
        %458 = vrot.lane.b32.xlu0 %v454, 8
        %v459 = vpop.permute.xlu0 %458
        %460 = vrot.lane.b32.xlu0 %v455, 8
        %v461 = vpop.permute.xlu0 %460
        %462 = vrot.lane.b32.xlu0 %v456, 8
        %v463 = vpop.permute.xlu0 %462
        %464 = vrot.lane.b32.xlu0 %v457, 8
        %v465 = vpop.permute.xlu0 %464
        %vm466 = vcmp.lt.s32.totalorder %v448, 8
        %v467 = vsel %vm466, %v463, %v465
        %v468 = vsel %vm466, %v461, %v463
        %v469 = vsel %vm466, %v459, %v461
        %v470 = vsel %vm466, %v465, %v459
        %v471 = vmul.f32 %v470, %v350
        %v472 = vmul.f32 %v469, %v354
        %v473 = vmul.f32 %v468, %v358
        %v474 = vmul.f32 %v467, %v362
        %475 = vrot.lane.b32.xlu0 %v471, 1
        %v476 = vpop.permute.xlu0 %475
        %477 = vrot.lane.b32.xlu0 %v472, 1
        %v478 = vpop.permute.xlu0 %477
        %479 = vrot.lane.b32.xlu0 %v473, 1
        %v480 = vpop.permute.xlu0 %479
        %481 = vrot.lane.b32.xlu0 %v474, 1
        %v482 = vpop.permute.xlu0 %481
        %vm483 = vcmp.lt.s32.totalorder %v448, 1
        %v484 = vsel %vm483, %v480, %v482
        %v485 = vsel %vm483, %v478, %v480
        %v486 = vsel %vm483, %v476, %v478
        %v487 = vsel %vm483, %v482, %v476
        %v488 = vmul.f32 %v487, %v398
        %v489 = vmul.f32 %v486, %v402
        %v490 = vmul.f32 %v485, %v406
        %v491 = vmul.f32 %v484, %v410
        %v492 = vpack.c.bf16 %v471, %v488
        %v493 = vpack.c.bf16 %v472, %v489
        %v494 = vpack.c.bf16 %v473, %v490
        %v495 = vpack.c.bf16 %v474, %v491
        %496 = vst [vmem:[#allocation2] sm:$0xff] %v492
        %497 = vst [vmem:[#allocation2 + $0x8] sm:$0xff] %v493
        %498 = vst [vmem:[#allocation2 + $0x10] sm:$0xff] %v494
        %499 = vst [vmem:[#allocation2 + $0x18] sm:$0xff] %v495
        %500 = vrot.lane.b32.xlu0 %v471, 127
        %v501 = vpop.permute.xlu0 %500
        %502 = vrot.lane.b32.xlu0 %v472, 127
        %v503 = vpop.permute.xlu0 %502
        %504 = vrot.lane.b32.xlu0 %v473, 127
        %v505 = vpop.permute.xlu0 %504
        %506 = vrot.lane.b32.xlu0 %v474, 127
        %v507 = vpop.permute.xlu0 %506
        %vm508 = vcmp.lt.s32.totalorder %v448, 127
        %v509 = vsel %vm508, %v505, %v507
        %v510 = vsel %vm508, %v503, %v505
        %v511 = vsel %vm508, %v501, %v503
        %v512 = vsel %vm508, %v507, %v501
        %v513 = vmul.f32 %v511, %v422
        %v514 = vmul.f32 %v510, %v426
        %v515 = vmul.f32 %v509, %v430
        %v516 = vmul.f32 %v512, %v434
        %517 = vrot.lane.b32.xlu0 %v454, 1
        %v518 = vpop.permute.xlu0 %517
        %519 = vrot.lane.b32.xlu0 %v455, 1
        %v520 = vpop.permute.xlu0 %519
        %521 = vrot.lane.b32.xlu0 %v456, 1
        %v522 = vpop.permute.xlu0 %521
        %523 = vrot.lane.b32.xlu0 %v457, 1
        %v524 = vpop.permute.xlu0 %523
        %v525 = vsel %vm483, %v522, %v524
        %v526 = vsel %vm483, %v520, %v522
        %v527 = vsel %vm483, %v518, %v520
        %v528 = vsel %vm483, %v524, %v518
        %v529 = vmul.f32 %v528, %v398
        %v530 = vmul.f32 %v527, %v402
        %v531 = vmul.f32 %v526, %v406
        %v532 = vmul.f32 %v525, %v410
        %v533 = vpack.c.bf16 %v529, %v513
        %v534 = vpack.c.bf16 %v530, %v514
        %v535 = vpack.c.bf16 %v531, %v515
        %v536 = vpack.c.bf16 %v532, %v516
        %537 = vst [vmem:[#allocation2 + $0x20] sm:$0xff] %v533
        %538 = vst [vmem:[#allocation2 + $0x28] sm:$0xff] %v534
        %539 = vst [vmem:[#allocation2 + $0x30] sm:$0xff] %v535
        %540 = vst [vmem:[#allocation2 + $0x38] sm:$0xff] %v536
        %541 = vrot.lane.b32.xlu0 %v454, 127
        %v542 = vpop.permute.xlu0 %541
        %543 = vrot.lane.b32.xlu0 %v455, 127
        %v544 = vpop.permute.xlu0 %543
        %545 = vrot.lane.b32.xlu0 %v456, 127
        %v546 = vpop.permute.xlu0 %545
        %547 = vrot.lane.b32.xlu0 %v457, 127
        %v548 = vpop.permute.xlu0 %547
        %v549 = vsel %vm508, %v546, %v548
        %v550 = vsel %vm508, %v544, %v546
        %v551 = vsel %vm508, %v542, %v544
        %v552 = vsel %vm508, %v548, %v542
        %v553 = vmul.f32 %v551, %v422
        %v554 = vmul.f32 %v550, %v426
        %v555 = vmul.f32 %v549, %v430
        %v556 = vmul.f32 %v552, %v434
        %v557 = vpack.c.bf16 %v553, %v454
        %v558 = vpack.c.bf16 %v554, %v455
        %v559 = vpack.c.bf16 %v555, %v456
        %v560 = vpack.c.bf16 %v556, %v457
        %561 = vst [vmem:[#allocation2 + $0x40] sm:$0xff] %v557
        %562 = vst [vmem:[#allocation2 + $0x48] sm:$0xff] %v558
        %563 = vst [vmem:[#allocation2 + $0x50] sm:$0xff] %v559
        %564 = vst [vmem:[#allocation2 + $0x58] sm:$0xff] %v560
        %565 = vrot.lane.b32.xlu0 %v454, 120
        %v566 = vpop.permute.xlu0 %565
        %567 = vrot.lane.b32.xlu0 %v455, 120
        %v568 = vpop.permute.xlu0 %567
        %569 = vrot.lane.b32.xlu0 %v456, 120
        %v570 = vpop.permute.xlu0 %569
        %571 = vrot.lane.b32.xlu0 %v457, 120
        %v572 = vpop.permute.xlu0 %571
        %vm573 = vcmp.lt.s32.totalorder %v448, 120
        %v574 = vsel %vm573, %v570, %v572
        %v575 = vsel %vm573, %v568, %v570
        %v576 = vsel %vm573, %v566, %v568
        %v577 = vsel %vm573, %v572, %v566
        %v578 = vmul.f32 %v576, %v374
        %v579 = vmul.f32 %v575, %v378
        %v580 = vmul.f32 %v574, %v382
        %v581 = vmul.f32 %v577, %v386
        %582 = vrot.lane.b32.xlu0 %v578, 1
        %v583 = vpop.permute.xlu0 %582
        %584 = vrot.lane.b32.xlu0 %v579, 1
        %v585 = vpop.permute.xlu0 %584
        %586 = vrot.lane.b32.xlu0 %v580, 1
        %v587 = vpop.permute.xlu0 %586
        %588 = vrot.lane.b32.xlu0 %v581, 1
        %v589 = vpop.permute.xlu0 %588
        %v590 = vsel %vm483, %v587, %v589
        %v591 = vsel %vm483, %v585, %v587
        %v592 = vsel %vm483, %v583, %v585
        %v593 = vsel %vm483, %v589, %v583
        %v594 = vmul.f32 %v593, %v398
        %v595 = vmul.f32 %v592, %v402
        %v596 = vmul.f32 %v591, %v406
        %v597 = vmul.f32 %v590, %v410
        %v598 = vpack.c.bf16 %v578, %v594
        %v599 = vpack.c.bf16 %v579, %v595
        %v600 = vpack.c.bf16 %v580, %v596
        %v601 = vpack.c.bf16 %v581, %v597
        %602 = vst [vmem:[#allocation2 + $0x60] sm:$0xff] %v598
        %603 = vst [vmem:[#allocation2 + $0x68] sm:$0xff] %v599
        %604 = vst [vmem:[#allocation2 + $0x70] sm:$0xff] %v600
        %605 = vst [vmem:[#allocation2 + $0x78] sm:$0xff] %v601
        %606 = vrot.lane.b32.xlu0 %v578, 127
        %v607 = vpop.permute.xlu0 %606
        %608 = vrot.lane.b32.xlu0 %v579, 127
        %v609 = vpop.permute.xlu0 %608
        %610 = vrot.lane.b32.xlu0 %v580, 127
        %v611 = vpop.permute.xlu0 %610
        %612 = vrot.lane.b32.xlu0 %v581, 127
        %v613 = vpop.permute.xlu0 %612
        %v614 = vsel %vm508, %v611, %v613
        %v615 = vsel %vm508, %v609, %v611
        %v616 = vsel %vm508, %v607, %v609
        %v617 = vsel %vm508, %v613, %v607
        %v618 = vmul.f32 %v616, %v422
        %v619 = vmul.f32 %v615, %v426
        %v620 = vmul.f32 %v614, %v430
        %v621 = vmul.f32 %v617, %v434
        %622 = vrot.lane.b32.xlu0 %v283, 8
        %v623 = vpop.permute.xlu0 %622
        %624 = vrot.lane.b32.xlu0 %v285, 8
        %v625 = vpop.permute.xlu0 %624
        %626 = vrot.lane.b32.xlu0 %v287, 8
        %v627 = vpop.permute.xlu0 %626
        %628 = vrot.lane.b32.xlu0 %v289, 8
        %v629 = vpop.permute.xlu0 %628
        %v630 = vsel %vm466, %v627, %v629
        %v631 = vsel %vm466, %v625, %v627
        %v632 = vsel %vm466, %v623, %v625
        %v633 = vsel %vm466, %v629, %v623
        %v634 = vmul.f32 %v633, %v350
        %v635 = vmul.f32 %v632, %v354
        %v636 = vmul.f32 %v631, %v358
        %v637 = vmul.f32 %v630, %v362
        %638 = vrot.lane.b32.xlu0 %v634, 1
        %v639 = vpop.permute.xlu0 %638
        %640 = vrot.lane.b32.xlu0 %v635, 1
        %v641 = vpop.permute.xlu0 %640
        %642 = vrot.lane.b32.xlu0 %v636, 1
        %v643 = vpop.permute.xlu0 %642
        %644 = vrot.lane.b32.xlu0 %v637, 1
        %v645 = vpop.permute.xlu0 %644
        %v646 = vsel %vm483, %v643, %v645
        %v647 = vsel %vm483, %v641, %v643
        %v648 = vsel %vm483, %v639, %v641
        %v649 = vsel %vm483, %v645, %v639
        %v650 = vmul.f32 %v649, %v398
        %v651 = vmul.f32 %v648, %v402
        %v652 = vmul.f32 %v647, %v406
        %v653 = vmul.f32 %v646, %v410
        %v654 = vpack.c.bf16 %v650, %v618
        %v655 = vpack.c.bf16 %v651, %v619
        %v656 = vpack.c.bf16 %v652, %v620
        %v657 = vpack.c.bf16 %v653, %v621
        %658 = vst [vmem:[#allocation2 + $0x80] sm:$0xff] %v654
        %659 = vst [vmem:[#allocation2 + $0x88] sm:$0xff] %v655
        %660 = vst [vmem:[#allocation2 + $0x90] sm:$0xff] %v656
        %661 = vst [vmem:[#allocation2 + $0x98] sm:$0xff] %v657
        %662 = vrot.lane.b32.xlu0 %v634, 127
        %v663 = vpop.permute.xlu0 %662
        %664 = vrot.lane.b32.xlu0 %v635, 127
        %v665 = vpop.permute.xlu0 %664
        %666 = vrot.lane.b32.xlu0 %v636, 127
        %v667 = vpop.permute.xlu0 %666
        %668 = vrot.lane.b32.xlu0 %v637, 127
        %v669 = vpop.permute.xlu0 %668
        %v670 = vsel %vm508, %v667, %v669
        %v671 = vsel %vm508, %v665, %v667
        %v672 = vsel %vm508, %v663, %v665
        %v673 = vsel %vm508, %v669, %v663
        %v674 = vmul.f32 %v672, %v422
        %v675 = vmul.f32 %v671, %v426
        %v676 = vmul.f32 %v670, %v430
        %v677 = vmul.f32 %v673, %v434
        %v678 = vpack.c.bf16 %v674, %v634
        %v679 = vpack.c.bf16 %v675, %v635
        %v680 = vpack.c.bf16 %v676, %v636
        %v681 = vpack.c.bf16 %v677, %v637
        %682 = vst [vmem:[#allocation2 + $0xa0] sm:$0xff] %v678
        %683 = vst [vmem:[#allocation2 + $0xa8] sm:$0xff] %v679
        %684 = vst [vmem:[#allocation2 + $0xb0] sm:$0xff] %v680
        %685 = vst [vmem:[#allocation2 + $0xb8] sm:$0xff] %v681
        %686 = vrot.lane.b32.xlu0 %v283, 1
        %v687 = vpop.permute.xlu0 %686
        %688 = vrot.lane.b32.xlu0 %v285, 1
        %v689 = vpop.permute.xlu0 %688
        %690 = vrot.lane.b32.xlu0 %v287, 1
        %v691 = vpop.permute.xlu0 %690
        %692 = vrot.lane.b32.xlu0 %v289, 1
        %v693 = vpop.permute.xlu0 %692
        %v694 = vsel %vm483, %v691, %v693
        %v695 = vsel %vm483, %v689, %v691
        %v696 = vsel %vm483, %v687, %v689
        %v697 = vsel %vm483, %v693, %v687
        %v698 = vmul.f32 %v697, %v398
        %v699 = vmul.f32 %v696, %v402
        %v700 = vmul.f32 %v695, %v406
        %v701 = vmul.f32 %v694, %v410
        %v702 = vpack.c.bf16 %v283, %v698
        %v703 = vpack.c.bf16 %v285, %v699
        %v704 = vpack.c.bf16 %v287, %v700
        %v705 = vpack.c.bf16 %v289, %v701
        %706 = vst [vmem:[#allocation2 + $0xc0] sm:$0xff] %v702
        %707 = vst [vmem:[#allocation2 + $0xc8] sm:$0xff] %v703
        %708 = vst [vmem:[#allocation2 + $0xd0] sm:$0xff] %v704
        %709 = vst [vmem:[#allocation2 + $0xd8] sm:$0xff] %v705
        %710 = vrot.lane.b32.xlu0 %v283, 127
        %v711 = vpop.permute.xlu0 %710
        %712 = vrot.lane.b32.xlu0 %v285, 127
        %v713 = vpop.permute.xlu0 %712
        %714 = vrot.lane.b32.xlu0 %v287, 127
        %v715 = vpop.permute.xlu0 %714
        %716 = vrot.lane.b32.xlu0 %v289, 127
        %v717 = vpop.permute.xlu0 %716
        %v718 = vsel %vm508, %v715, %v717
        %v719 = vsel %vm508, %v713, %v715
        %v720 = vsel %vm508, %v711, %v713
        %v721 = vsel %vm508, %v717, %v711
        %v722 = vmul.f32 %v720, %v422
        %v723 = vmul.f32 %v719, %v426
        %v724 = vmul.f32 %v718, %v430
        %v725 = vmul.f32 %v721, %v434
        %726 = vrot.lane.b32.xlu0 %v283, 120
        %v727 = vpop.permute.xlu0 %726
        %728 = vrot.lane.b32.xlu0 %v285, 120
        %v729 = vpop.permute.xlu0 %728
        %730 = vrot.lane.b32.xlu0 %v287, 120
        %v731 = vpop.permute.xlu0 %730
        %732 = vrot.lane.b32.xlu0 %v289, 120
        %v733 = vpop.permute.xlu0 %732
        %v734 = vsel %vm573, %v731, %v733
        %v735 = vsel %vm573, %v729, %v731
        %v736 = vsel %vm573, %v727, %v729
        %v737 = vsel %vm573, %v733, %v727
        %v738 = vmul.f32 %v736, %v374
        %v739 = vmul.f32 %v735, %v378
        %v740 = vmul.f32 %v734, %v382
        %v741 = vmul.f32 %v737, %v386
        %742 = vrot.lane.b32.xlu0 %v738, 1
        %v743 = vpop.permute.xlu0 %742
        %744 = vrot.lane.b32.xlu0 %v739, 1
        %v745 = vpop.permute.xlu0 %744
        %746 = vrot.lane.b32.xlu0 %v740, 1
        %v747 = vpop.permute.xlu0 %746
        %748 = vrot.lane.b32.xlu0 %v741, 1
        %v749 = vpop.permute.xlu0 %748
        %v750 = vsel %vm483, %v747, %v749
        %v751 = vsel %vm483, %v745, %v747
        %v752 = vsel %vm483, %v743, %v745
        %v753 = vsel %vm483, %v749, %v743
        %v754 = vmul.f32 %v753, %v398
        %v755 = vmul.f32 %v752, %v402
        %v756 = vmul.f32 %v751, %v406
        %v757 = vmul.f32 %v750, %v410
        %v758 = vpack.c.bf16 %v754, %v722
        %v759 = vpack.c.bf16 %v755, %v723
        %v760 = vpack.c.bf16 %v756, %v724
        %v761 = vpack.c.bf16 %v757, %v725
        %762 = vst [vmem:[#allocation2 + $0xe0] sm:$0xff] %v758
        %763 = vst [vmem:[#allocation2 + $0xe8] sm:$0xff] %v759
        %764 = vst [vmem:[#allocation2 + $0xf0] sm:$0xff] %v760
        %765 = vst [vmem:[#allocation2 + $0xf8] sm:$0xff] %v761
        %766 = vrot.lane.b32.xlu0 %v738, 127
        %v767 = vpop.permute.xlu0 %766
        %768 = vrot.lane.b32.xlu0 %v739, 127
        %v769 = vpop.permute.xlu0 %768
        %770 = vrot.lane.b32.xlu0 %v740, 127
        %v771 = vpop.permute.xlu0 %770
        %772 = vrot.lane.b32.xlu0 %v741, 127
        %v773 = vpop.permute.xlu0 %772
        %v774 = vsel %vm508, %v771, %v773
        %v775 = vsel %vm508, %v769, %v771
        %v776 = vsel %vm508, %v767, %v769
        %v777 = vsel %vm508, %v773, %v767
        %v778 = vmul.f32 %v776, %v422
        %v779 = vmul.f32 %v775, %v426
        %v780 = vmul.f32 %v774, %v430
        %v781 = vmul.f32 %v777, %v434
        %v782 = vpack.c.bf16 %v778, %v738
        %v783 = vpack.c.bf16 %v779, %v739
        %v784 = vpack.c.bf16 %v780, %v740
        %v785 = vpack.c.bf16 %v781, %v741
        %786 = vst [vmem:[#allocation2 + $0x100] sm:$0xff] %v782
        %787 = vst [vmem:[#allocation2 + $0x108] sm:$0xff] %v783
        %788 = vst [vmem:[#allocation2 + $0x110] sm:$0xff] %v784
        %789 = vst [vmem:[#allocation2 + $0x118] sm:$0xff] %v785
        %v790 = vmul.f32 %v452, %v326
        %v791 = vmul.f32 %v451, %v330
        %v792 = vmul.f32 %v450, %v334
        %v793 = vmul.f32 %v453, %v338
        %794 = vrot.lane.b32.xlu0 %v790, 8
        %v795 = vpop.permute.xlu0 %794
        %796 = vrot.lane.b32.xlu0 %v791, 8
        %v797 = vpop.permute.xlu0 %796
        %798 = vrot.lane.b32.xlu0 %v792, 8
        %v799 = vpop.permute.xlu0 %798
        %800 = vrot.lane.b32.xlu0 %v793, 8
        %v801 = vpop.permute.xlu0 %800
        %v802 = vsel %vm466, %v799, %v801
        %v803 = vsel %vm466, %v797, %v799
        %v804 = vsel %vm466, %v795, %v797
        %v805 = vsel %vm466, %v801, %v795
        %v806 = vmul.f32 %v805, %v350
        %v807 = vmul.f32 %v804, %v354
        %v808 = vmul.f32 %v803, %v358
        %v809 = vmul.f32 %v802, %v362
        %810 = vrot.lane.b32.xlu0 %v806, 1
        %v811 = vpop.permute.xlu0 %810
        %812 = vrot.lane.b32.xlu0 %v807, 1
        %v813 = vpop.permute.xlu0 %812
        %814 = vrot.lane.b32.xlu0 %v808, 1
        %v815 = vpop.permute.xlu0 %814
        %816 = vrot.lane.b32.xlu0 %v809, 1
        %v817 = vpop.permute.xlu0 %816
        %v818 = vsel %vm483, %v815, %v817
        %v819 = vsel %vm483, %v813, %v815
        %v820 = vsel %vm483, %v811, %v813
        %v821 = vsel %vm483, %v817, %v811
        %v822 = vmul.f32 %v821, %v398
        %v823 = vmul.f32 %v820, %v402
        %v824 = vmul.f32 %v819, %v406
        %v825 = vmul.f32 %v818, %v410
        %v826 = vpack.c.bf16 %v806, %v822
        %v827 = vpack.c.bf16 %v807, %v823
        %v828 = vpack.c.bf16 %v808, %v824
        %v829 = vpack.c.bf16 %v809, %v825
        %830 = vst [vmem:[#allocation2 + $0x120] sm:$0xff] %v826
        %831 = vst [vmem:[#allocation2 + $0x128] sm:$0xff] %v827
        %832 = vst [vmem:[#allocation2 + $0x130] sm:$0xff] %v828
        %833 = vst [vmem:[#allocation2 + $0x138] sm:$0xff] %v829
        %834 = vrot.lane.b32.xlu0 %v806, 127
        %v835 = vpop.permute.xlu0 %834
        %836 = vrot.lane.b32.xlu0 %v807, 127
        %v837 = vpop.permute.xlu0 %836
        %838 = vrot.lane.b32.xlu0 %v808, 127
        %v839 = vpop.permute.xlu0 %838
        %840 = vrot.lane.b32.xlu0 %v809, 127
        %v841 = vpop.permute.xlu0 %840
        %v842 = vsel %vm508, %v839, %v841
        %v843 = vsel %vm508, %v837, %v839
        %v844 = vsel %vm508, %v835, %v837
        %v845 = vsel %vm508, %v841, %v835
        %v846 = vmul.f32 %v844, %v422
        %v847 = vmul.f32 %v843, %v426
        %v848 = vmul.f32 %v842, %v430
        %v849 = vmul.f32 %v845, %v434
        %850 = vrot.lane.b32.xlu0 %v790, 1
        %v851 = vpop.permute.xlu0 %850
        %852 = vrot.lane.b32.xlu0 %v791, 1
        %v853 = vpop.permute.xlu0 %852
        %854 = vrot.lane.b32.xlu0 %v792, 1
        %v855 = vpop.permute.xlu0 %854
        %856 = vrot.lane.b32.xlu0 %v793, 1
        %v857 = vpop.permute.xlu0 %856
        %v858 = vsel %vm483, %v855, %v857
        %v859 = vsel %vm483, %v853, %v855
        %v860 = vsel %vm483, %v851, %v853
        %v861 = vsel %vm483, %v857, %v851
        %v862 = vmul.f32 %v861, %v398
        %v863 = vmul.f32 %v860, %v402
        %v864 = vmul.f32 %v859, %v406
        %v865 = vmul.f32 %v858, %v410
        %v866 = vpack.c.bf16 %v862, %v846
        %v867 = vpack.c.bf16 %v863, %v847
        %v868 = vpack.c.bf16 %v864, %v848
        %v869 = vpack.c.bf16 %v865, %v849
        %870 = vst [vmem:[#allocation2 + $0x140] sm:$0xff] %v866
        %871 = vst [vmem:[#allocation2 + $0x148] sm:$0xff] %v867
        %872 = vst [vmem:[#allocation2 + $0x150] sm:$0xff] %v868
        %873 = vst [vmem:[#allocation2 + $0x158] sm:$0xff] %v869
        %874 = vrot.lane.b32.xlu0 %v790, 127
        %v875 = vpop.permute.xlu0 %874
        %876 = vrot.lane.b32.xlu0 %v791, 127
        %v877 = vpop.permute.xlu0 %876
        %878 = vrot.lane.b32.xlu0 %v792, 127
        %v879 = vpop.permute.xlu0 %878
        %880 = vrot.lane.b32.xlu0 %v793, 127
        %v881 = vpop.permute.xlu0 %880
        %v882 = vsel %vm508, %v879, %v881
        %v883 = vsel %vm508, %v877, %v879
        %v884 = vsel %vm508, %v875, %v877
        %v885 = vsel %vm508, %v881, %v875
        %v886 = vmul.f32 %v884, %v422
        %v887 = vmul.f32 %v883, %v426
        %v888 = vmul.f32 %v882, %v430
        %v889 = vmul.f32 %v885, %v434
        %v890 = vpack.c.bf16 %v886, %v790
        %v891 = vpack.c.bf16 %v887, %v791
        %v892 = vpack.c.bf16 %v888, %v792
        %v893 = vpack.c.bf16 %v889, %v793
        %894 = vst [vmem:[#allocation2 + $0x160] sm:$0xff] %v890
        %895 = vst [vmem:[#allocation2 + $0x168] sm:$0xff] %v891
        %896 = vst [vmem:[#allocation2 + $0x170] sm:$0xff] %v892
        %897 = vst [vmem:[#allocation2 + $0x178] sm:$0xff] %v893
        %898 = vrot.lane.b32.xlu0 %v790, 120
        %v899 = vpop.permute.xlu0 %898
        %900 = vrot.lane.b32.xlu0 %v791, 120
        %v901 = vpop.permute.xlu0 %900
        %902 = vrot.lane.b32.xlu0 %v792, 120
        %v903 = vpop.permute.xlu0 %902
        %904 = vrot.lane.b32.xlu0 %v793, 120
        %v905 = vpop.permute.xlu0 %904
        %v906 = vsel %vm573, %v903, %v905
        %v907 = vsel %vm573, %v901, %v903
        %v908 = vsel %vm573, %v899, %v901
        %v909 = vsel %vm573, %v905, %v899
        %v910 = vmul.f32 %v908, %v374
        %v911 = vmul.f32 %v907, %v378
        %v912 = vmul.f32 %v906, %v382
        %v913 = vmul.f32 %v909, %v386
        %914 = vrot.lane.b32.xlu0 %v910, 1
        %v915 = vpop.permute.xlu0 %914
        %916 = vrot.lane.b32.xlu0 %v911, 1
        %v917 = vpop.permute.xlu0 %916
        %918 = vrot.lane.b32.xlu0 %v912, 1
        %v919 = vpop.permute.xlu0 %918
        %920 = vrot.lane.b32.xlu0 %v913, 1
        %v921 = vpop.permute.xlu0 %920
        %v922 = vsel %vm483, %v919, %v921
        %v923 = vsel %vm483, %v917, %v919
        %v924 = vsel %vm483, %v915, %v917
        %v925 = vsel %vm483, %v921, %v915
        %v926 = vmul.f32 %v925, %v398
        %v927 = vmul.f32 %v924, %v402
        %v928 = vmul.f32 %v923, %v406
        %v929 = vmul.f32 %v922, %v410
        %v930 = vpack.c.bf16 %v910, %v926
        %v931 = vpack.c.bf16 %v911, %v927
        %v932 = vpack.c.bf16 %v912, %v928
        %v933 = vpack.c.bf16 %v913, %v929
        %934 = vst [vmem:[#allocation2 + $0x180] sm:$0xff] %v930
        %935 = vst [vmem:[#allocation2 + $0x188] sm:$0xff] %v931
        %936 = vst [vmem:[#allocation2 + $0x190] sm:$0xff] %v932
        %937 = vst [vmem:[#allocation2 + $0x198] sm:$0xff] %v933
        %938 = vrot.lane.b32.xlu0 %v910, 127
        %v939 = vpop.permute.xlu0 %938
        %940 = vrot.lane.b32.xlu0 %v911, 127
        %v941 = vpop.permute.xlu0 %940
        %942 = vrot.lane.b32.xlu0 %v912, 127
        %v943 = vpop.permute.xlu0 %942
        %944 = vrot.lane.b32.xlu0 %v913, 127
        %v945 = vpop.permute.xlu0 %944
        %v946 = vsel %vm508, %v943, %v945
        %v947 = vsel %vm508, %v941, %v943
        %v948 = vsel %vm508, %v939, %v941
        %v949 = vsel %vm508, %v945, %v939
        %v950 = vmul.f32 %v948, %v422
        %v951 = vmul.f32 %v947, %v426
        %v952 = vmul.f32 %v946, %v430
        %v953 = vmul.f32 %v949, %v434
        %v954 = vpack.c.bf16 0.0, %v950
        %v955 = vpack.c.bf16 0.0, %v951
        %v956 = vpack.c.bf16 0.0, %v952
        %v957 = vpack.c.bf16 0.0, %v953
        %958 = vst [vmem:[#allocation2 + $0x1a0] sm:$0xff] %v954
        %959 = vst [vmem:[#allocation2 + $0x1a8] sm:$0xff] %v955
        %960 = vst [vmem:[#allocation2 + $0x1b0] sm:$0xff] %v956
        %961 = vst [vmem:[#allocation2 + $0x1b8] sm:$0xff] %v957
        %v962 = vld [vmem:[%s3] sm:$0xff]
        %v963 = vld [vmem:[%s3 + $0x8] sm:$0xff]
        %v964 = vld [vmem:[#allocation2] sm:$0xff]
        %v965 = vld [vmem:[#allocation2 + $0x8] sm:$0xff]
        %v966 = vld [vmem:[#allocation2 + $0x10] sm:$0xff]
        %v967 = vld [vmem:[#allocation2 + $0x18] sm:$0xff]
        %v968 = vld [vmem:[#allocation2 + $0x20] sm:$0xff]
        %v969 = vld [vmem:[#allocation2 + $0x28] sm:$0xff]
        %v970 = vld [vmem:[#allocation2 + $0x30] sm:$0xff]
        %v971 = vld [vmem:[#allocation2 + $0x38] sm:$0xff]
        %v972 = vld [vmem:[#allocation2 + $0x40] sm:$0xff]
        %v973 = vld [vmem:[#allocation2 + $0x48] sm:$0xff]
        %v974 = vld [vmem:[#allocation2 + $0x50] sm:$0xff]
        %v975 = vld [vmem:[#allocation2 + $0x58] sm:$0xff]
        %v976 = vld [vmem:[#allocation2 + $0x60] sm:$0xff]
        %v977 = vld [vmem:[#allocation2 + $0x68] sm:$0xff]
        %v978 = vld [vmem:[#allocation2 + $0x70] sm:$0xff]
        %v979 = vld [vmem:[#allocation2 + $0x78] sm:$0xff]
        %v980 = vld [vmem:[#allocation2 + $0x80] sm:$0xff]
        %v981 = vld [vmem:[#allocation2 + $0x88] sm:$0xff]
        %v982 = vld [vmem:[#allocation2 + $0x90] sm:$0xff]
        %v983 = vld [vmem:[#allocation2 + $0x98] sm:$0xff]
        %v984 = vld [vmem:[#allocation2 + $0xa0] sm:$0xff]
        %v985 = vld [vmem:[#allocation2 + $0xa8] sm:$0xff]
        %v986 = vld [vmem:[#allocation2 + $0xb0] sm:$0xff]
        %v987 = vld [vmem:[#allocation2 + $0xb8] sm:$0xff]
        %v988 = vld [vmem:[#allocation2 + $0xc0] sm:$0xff]
        %v989 = vld [vmem:[#allocation2 + $0xc8] sm:$0xff]
        %v990 = vld [vmem:[#allocation2 + $0xd0] sm:$0xff]
        %v991 = vld [vmem:[#allocation2 + $0xd8] sm:$0xff]
        %v992 = vld [vmem:[#allocation2 + $0xe0] sm:$0xff]
        %v993 = vld [vmem:[#allocation2 + $0xe8] sm:$0xff]
        %v994 = vld [vmem:[#allocation2 + $0xf0] sm:$0xff]
        %v995 = vld [vmem:[#allocation2 + $0xf8] sm:$0xff]
        %v996 = vld [vmem:[#allocation2 + $0x100] sm:$0xff]
        %v997 = vld [vmem:[#allocation2 + $0x108] sm:$0xff]
        %v998 = vld [vmem:[#allocation2 + $0x110] sm:$0xff]
        %v999 = vld [vmem:[#allocation2 + $0x118] sm:$0xff]
        %v1000 = vld [vmem:[#allocation2 + $0x120] sm:$0xff]
        %v1001 = vld [vmem:[#allocation2 + $0x128] sm:$0xff]
        %v1002 = vld [vmem:[#allocation2 + $0x130] sm:$0xff]
        %v1003 = vld [vmem:[#allocation2 + $0x138] sm:$0xff]
        %v1004 = vld [vmem:[#allocation2 + $0x140] sm:$0xff]
        %v1005 = vld [vmem:[#allocation2 + $0x148] sm:$0xff]
        %v1006 = vld [vmem:[#allocation2 + $0x150] sm:$0xff]
        %v1007 = vld [vmem:[#allocation2 + $0x158] sm:$0xff]
        %v1008 = vld [vmem:[#allocation2 + $0x160] sm:$0xff]
        %v1009 = vld [vmem:[#allocation2 + $0x168] sm:$0xff]
        %v1010 = vld [vmem:[#allocation2 + $0x170] sm:$0xff]
        %v1011 = vld [vmem:[#allocation2 + $0x178] sm:$0xff]
        %v1012 = vld [vmem:[#allocation2 + $0x180] sm:$0xff]
        %v1013 = vld [vmem:[#allocation2 + $0x188] sm:$0xff]
        %v1014 = vld [vmem:[#allocation2 + $0x190] sm:$0xff]
        %v1015 = vld [vmem:[#allocation2 + $0x198] sm:$0xff]
        %v1016 = vld [vmem:[#allocation2 + $0x1a0] sm:$0xff]
        %v1017 = vld [vmem:[#allocation2 + $0x1a8] sm:$0xff]
        %v1018 = vld [vmem:[#allocation2 + $0x1b0] sm:$0xff]
        %v1019 = vld [vmem:[#allocation2 + $0x1b8] sm:$0xff]
        %v1022 = vunpack.c.l.b16 %v962
        %v1023 = vunpack.c.h.b16 %v962
        %v1024 = vunpack.c.l.b16 %v963
        %v1025 = vunpack.c.h.b16 %v963
        %v1026 = vpack.c.b16 %v1024, %v1022
        %v1027 = vpack.c.b16 %v1025, %v1023
        %vm1029 = vcmask 785408
        %v1031 = vsel %vm1029, %v1027, 0
        %1033 = vmatprep.subr.bf16.mxu0 %v965
        %1034 = vmatpush1.bf16.msra.mxu0 %v964
        %1035 = vmatprep.subr.bf16.mxu0 %v969
        %1036 = vmatpush1.bf16.msra.mxu0 %v968
        %1037 = vmatprep.subr.bf16.mxu0 %v973
        %1038 = vmatpush1.bf16.msra.mxu0 %v972
        %1039 = vmatprep.subr.bf16.mxu0 %v977
        %1040 = vmatpush1.bf16.msra.mxu0 %v976
        %1041 = vmatprep.subr.bf16.mxu0 %v981
        %1042 = vmatpush1.bf16.msra.mxu0 %v980
        %1043 = vmatprep.subr.bf16.mxu0 %v985
        %1044 = vmatpush1.bf16.msra.mxu0 %v984
        %1045 = vmatprep.subr.bf16.mxu0 %v989
        %1046 = vmatpush1.bf16.msra.mxu0 %v988
        %1047 = vmatprep.subr.bf16.mxu0 %v993
        %1048 = vmatpush1.bf16.msra.mxu0 %v992
        %1049 = vmatprep.subr.bf16.mxu0 %v997
        %1050 = vmatpush1.bf16.msra.mxu0 %v996
        %1051 = vmatprep.subr.bf16.mxu0 %v1001
        %1052 = vmatpush1.bf16.msra.mxu0 %v1000
        %1053 = vmatprep.subr.bf16.mxu0 %v1005
        %1054 = vmatpush1.bf16.msra.mxu0 %v1004
        %1055 = vmatprep.subr.bf16.mxu0 %v1009
        %1056 = vmatpush1.bf16.msra.mxu0 %v1008
        %1057 = vmatprep.subr.bf16.mxu0 %v1013
        %1058 = vmatpush1.bf16.msra.mxu0 %v1012
        %1059 = vmatprep.subr.bf16.mxu0 %v1017
        %1060 = vmatpush1.bf16.msra.mxu0 %v1016
        %1061 = vmatprep.subr.bf16.mxu0 0
        %1062 = vmatpush1.bf16.msra.mxu0 0
        %1063 = vmatprep.subr.bf16.mxu0 0
        %1064 = vmatpush1.bf16.msra.mxu0 0
        %1065 = vmatprep.mubr.bf16.mxu0 %v1031
        %1066 = vmatmul.mubr.bf16.gmra.mrb[0].mxu0 %v1026
        %v1067 = vpop.f32.mrb[0].mxu0
        %v1068 = vadd.f32 0.0, %v1067
        %v1069 = vpop.f32.mrb[0].mxu0
        %v1070 = vadd.f32 0.0, %v1069
        %v1071 = vpop.f32.mrb[0].mxu0
        %v1072 = vadd.f32 0.0, %v1071
        %v1073 = vpop.f32.mrb[0].mxu0
        %v1074 = vadd.f32 0.0, %v1073
        %1075 = vdwg.mxu0
        %1076 = vmatprep.subr.bf16.mxu0 %v967
        %1077 = vmatpush1.bf16.msra.mxu0 %v966
        %1078 = vmatprep.subr.bf16.mxu0 %v971
        %1079 = vmatpush1.bf16.msra.mxu0 %v970
        %1080 = vmatprep.subr.bf16.mxu0 %v975
        %1081 = vmatpush1.bf16.msra.mxu0 %v974
        %1082 = vmatprep.subr.bf16.mxu0 %v979
        %1083 = vmatpush1.bf16.msra.mxu0 %v978
        %1084 = vmatprep.subr.bf16.mxu0 %v983
        %1085 = vmatpush1.bf16.msra.mxu0 %v982
        %1086 = vmatprep.subr.bf16.mxu0 %v987
        %1087 = vmatpush1.bf16.msra.mxu0 %v986
        %1088 = vmatprep.subr.bf16.mxu0 %v991
        %1089 = vmatpush1.bf16.msra.mxu0 %v990
        %1090 = vmatprep.subr.bf16.mxu0 %v995
        %1091 = vmatpush1.bf16.msra.mxu0 %v994
        %1092 = vmatprep.subr.bf16.mxu0 %v999
        %1093 = vmatpush1.bf16.msra.mxu0 %v998
        %1094 = vmatprep.subr.bf16.mxu0 %v1003
        %1095 = vmatpush1.bf16.msra.mxu0 %v1002
        %1096 = vmatprep.subr.bf16.mxu0 %v1007
        %1097 = vmatpush1.bf16.msra.mxu0 %v1006
        %1098 = vmatprep.subr.bf16.mxu0 %v1011
        %1099 = vmatpush1.bf16.msra.mxu0 %v1010
        %1100 = vmatprep.subr.bf16.mxu0 %v1015
        %1101 = vmatpush1.bf16.msra.mxu0 %v1014
        %1102 = vmatprep.subr.bf16.mxu0 %v1019
        %1103 = vmatpush1.bf16.msra.mxu0 %v1018
        %1104 = vmatprep.subr.bf16.mxu0 0
        %1105 = vmatpush1.bf16.msra.mxu0 0
        %1106 = vmatprep.subr.bf16.mxu0 0
        %1107 = vmatpush1.bf16.msra.mxu0 0
        %1108 = vmatprep.mubr.bf16.mxu0 %v1031
        %1109 = vmatmul.mubr.bf16.gmra.mrb[0].mxu0 %v1026
        %v1110 = vpop.f32.mrb[0].mxu0
        %v1111 = vadd.f32 0.0, %v1110
        %v1112 = vpop.f32.mrb[0].mxu0
        %v1113 = vadd.f32 0.0, %v1112
        %v1114 = vpop.f32.mrb[0].mxu0
        %v1115 = vadd.f32 0.0, %v1114
        %v1116 = vpop.f32.mrb[0].mxu0
        %v1117 = vadd.f32 0.0, %v1116
        %1118 = vdwg.mxu0
        %1119 = vst [vmem:[%s240] sm:$0xff] %v1068
        %1120 = vst [vmem:[%s240 + $0x8] sm:$0xff] %v1070
        %1121 = vst [vmem:[%s240 + $0x10] sm:$0xff] %v1111
        %1122 = vst [vmem:[%s240 + $0x18] sm:$0xff] %v1113
        %1123 = vst [vmem:[%s240 + $0x20] sm:$0xff] %v1072
        %1124 = vst [vmem:[%s240 + $0x28] sm:$0xff] %v1074
        %1125 = vst [vmem:[%s240 + $0x30] sm:$0xff] %v1115
        %1126 = vst [vmem:[%s240 + $0x38] sm:$0xff] %v1117
        %s1127 = sand.u32 %s140, 1
        %s1128 = scalar_lea.sflag [#allocation5], %s1127
        %s1129 = sand.u32 %s140, 1
        %s1130 = smul.addr %s1129, 64
        %s1131 = scalar_lea.vmem [#allocation6], %s1130
        // Predicated region
        $region45: #{tpu_custom_call.1} parent=39 // pred_check
          %p1132 = pneg %p150
        $region46: #{tpu_custom_call.1} parent=39 // pred_check_branch
          %1134 = sbr.rel (%p1132) target = $region48
        $region47: #{tpu_custom_call.1} parent=39 // pred_region
          %s1136 = ssub.s32 1024, 1024
          %1137 = vsyncadd %s1128, %s1136
          %s1138 = smul.addr %s22, 8
          %s1139 = smul.addr %s1138, 128
          %s1140 = scalar_lea.hbm %s5, %s1139
          %s1141 = sshll.u32 %s1131, 4
          %s1142 = int_to_ptr.vmem [resolvable:$true] %s1141
          %1147 = dma.vmem_to_hbm [thread:$0]  %s1142, 1024, %s1140, %s1128, 512, 512, 32
        $region48: #{tpu_custom_call.1} parent=39 // pred_fallthru
          _
      $region40: #{tpu_custom_call.1} parent=5 // pred_fallthru
        _
      %p1148 = scmp.le.s32.totalorder 2, %s17
      // Predicated region
      $region49: #{tpu_custom_call.1} parent=5 // pred_check
        %p1149 = pneg %p1148
      $region50: #{tpu_custom_call.1} parent=5 // pred_check_branch
        %1151 = sbr.rel (%p1149) target = $region52
      $region51: #{tpu_custom_call.1} parent=5 // pred_region
        %s1152 = ssub.s32 %s17, 2
        // Predicated region
        $region53: #{tpu_custom_call.1} parent=51 // pred_check
          %p1153 = pneg %p156
        $region54: #{tpu_custom_call.1} parent=51 // pred_check_branch
          %1155 = sbr.rel (%p1153) target = $region56
        $region55: #{tpu_custom_call.1} parent=51 // pred_region
          %s1156 = sand.u32 %s141, 1
          %s1157 = scalar_lea.sflag [#allocation5], %s1156
          %s1158 = sand.u32 %s141, 1
          %s1159 = smul.addr %s1158, 64
          %s1160 = scalar_lea.vmem [#allocation6], %s1159
          %1161 = dma.done %s1157, 1024
        $region56: #{tpu_custom_call.1} parent=51 // pred_fallthru
          _
      $region52: #{tpu_custom_call.1} parent=5 // pred_fallthru
        _
    $region6: #{tpu_custom_call.1} parent=1 // loop_footer
      %s21 = sadd.s32 1, %s17
    $region7: #{tpu_custom_call.1} parent=1 // loop_footer_branch
      %16 = sbr.rel target = $region3
    $region8: #{tpu_custom_call.1} parent=1 // loop_exit
      _
    %1162 = vsyncpa [#allocation4], 1
    %s1163 = scalar_lea.sflag [#allocation4], 1
    %1164 = vsyncpa %s1163, 1
    %1165 = vsyncpa [#allocation5], 1
    %s1166 = scalar_lea.sflag [#allocation5], 1
    %1167 = vsyncpa %s1166, 1

</llo_original>
